<compile_context>
chip_gen: v5e
topology: v5e:2x2
jax: 0.10.0
libtpu: 0.0.40
codegen_flags: <defaults>
</compile_context>

<pallas_src>
import functools
import math

import jax
import jax.numpy as jnp
from jax import lax
from jax.experimental import pallas as pl
from jax.experimental.pallas import tpu as pltpu


def _round_up(x, m):
    return ((x + m - 1) // m) * m


# ----------------------------- Pallas kernel --------------------------------

def _conv_bn_act_kernel(x_ref, w_ref, b_ref, o_ref, *,
                        kh, kw, wp, stride, tl, win_len, n_l, use_act):
    """One (batch, group, spatial-tile) grid step.

    x_ref: (Cin_k, Lp)            bf16  flattened zero-padded image (one image, one group)
    w_ref: (kh*kw, Co_pad, Cin_k) bf16  conv weights with BN scale folded in
    b_ref: (Co_pad, 1)            f32   folded BN bias
    o_ref: (Co_pad, TL)           f32   "wide" output tile (flattened Ho x Wp columns)
    """
    if n_l == 1:
        base = 0                      # static — the common small-image case
    else:
        # stride * tl is a multiple of 128 -> dynamic window start is vreg-aligned.
        base = pl.multiple_of(pl.program_id(2) * (stride * tl), 128)

    # One aligned load of the input window (tile + receptive-field halo); the kh*kw
    # shifted views below are cheap static slices of this VMEM-resident value.
    xwin = x_ref[:, pl.ds(base, win_len)]                     # (Cin_k, win_len)

    acc = jnp.zeros(o_ref.shape, jnp.float32)                 # (Co_pad, TL) f32
    for i in range(kh):
        for j in range(kw):
            r = i * wp + j
            if stride == 1:
                piece = xwin[:, r:r + tl]                     # (Cin_k, TL)
            else:
                # TODO(synk): stride>1 uses a lane-strided slice; functional but untuned.
                piece = lax.slice(xwin, (0, r),
                                  (xwin.shape[0], r + stride * (tl - 1) + 1),
                                  (1, stride))
            acc = acc + jnp.dot(w_ref[i * kw + j], piece,
                                preferred_element_type=jnp.float32)

    y = acc + b_ref[...]                                      # per-channel bias
    if use_act:
        y = jnp.maximum(y, 0.0)
    o_ref[...] = y.astype(o_ref.dtype)


# ------------------------------ wrapper --------------------------------------

def conv_bn_act(x_nchw, weight, gamma, beta, running_mean, running_var, *,
                stride, groups=1, use_act=True, eps=1e-5):
    """Forward pass of ConvBNAct (inference BN semantics).

    x_nchw : (N, Cin, H, W)      weight: (Cout, Cin//groups, KH, KW)
    gamma/beta/running_mean/running_var: (Cout,)
    Returns (N, Cout, Ho, Wo) in NCHW.
    """
    n, cin, h, w = x_nchw.shape
    cout, cin_g, kh, kw = weight.shape
    assert cin == cin_g * groups and cout % groups == 0
    cout_g = cout // groups
    pad_h = (kh - 1) // 2
    pad_w = (kw - 1) // 2
    hp = h + 2 * pad_h
    wp = w + 2 * pad_w
    ho = (hp - kh) // stride + 1
    wo = (wp - kw) // stride + 1

    # ---- geometry of the flattened "wide" output (Ho rows x Wp cols, cols>=Wo garbage)
    l_raw = ho * wp
    tl = min(2048, _round_up(l_raw, 128))          # lane tile (multiple of 128)
    l_out = _round_up(l_raw, tl)
    n_l = l_out // tl
    halo = (kh - 1) * wp + (kw - 1)                # receptive-field halo in flat coords
    win_len = stride * (tl - 1) + halo + 1
    lp = _round_up(max(stride * (l_out - 1) + halo + 1, hp * wp), 128)

    co_pad = _round_up(cout_g, 128)                # lane-dense MXU / store width
    cin_k = _round_up(cin_g, 8)                    # pad contraction dim to sublane tile

    # ---- fold BatchNorm (inference) into weights / bias -------------------------
    scale = (gamma / jnp.sqrt(running_var + eps)).astype(jnp.float32)   # (Cout,)
    bias = (beta - running_mean * scale).astype(jnp.float32)            # (Cout,)

    wg = weight.astype(jnp.float32).reshape(groups, cout_g, cin_g, kh, kw)
    wg = wg * scale.reshape(groups, cout_g)[:, :, None, None, None]
    wg = jnp.transpose(wg, (0, 3, 4, 1, 2)).reshape(groups, kh * kw, cout_g, cin_g)
    wg = jnp.pad(wg, ((0, 0), (0, 0), (0, co_pad - cout_g), (0, cin_k - cin_g)))
    wg = wg.astype(jnp.bfloat16)                                         # (G, kh*kw, Co_pad, Cin_k)

    bg = jnp.pad(bias.reshape(groups, cout_g), ((0, 0), (0, co_pad - cout_g)))
    bg = bg.reshape(groups, co_pad, 1).astype(jnp.float32)               # (G, Co_pad, 1)

    # ---- input: NCHW -> zero-pad spatially -> grouped, flattened spatial --------
    xp = jnp.pad(x_nchw.astype(jnp.bfloat16),
                 ((0, 0), (0, 0), (pad_h, pad_h), (pad_w, pad_w)))       # (N, Cin, Hp, Wp)
    xf = xp.reshape(n, groups, cin_g, hp * wp)
    xf = jnp.pad(xf, ((0, 0), (0, 0), (0, cin_k - cin_g), (0, lp - hp * wp)))
    # xf: (N, G, Cin_k, Lp) bf16

    kernel = functools.partial(
        _conv_bn_act_kernel, kh=kh, kw=kw, wp=wp, stride=stride,
        tl=tl, win_len=win_len, n_l=n_l, use_act=use_act)

    out = pl.pallas_call(
        kernel,
        out_shape=jax.ShapeDtypeStruct((n, groups, co_pad, l_out), jnp.float32),
        grid_spec=pltpu.PrefetchScalarGridSpec(
            num_scalar_prefetch=0,
            grid=(n, groups, n_l),
            in_specs=[
                # whole (padded, flattened) image of one group; revisited across l.
                pl.BlockSpec((None, None, cin_k, lp), lambda b, g, l: (b, g, 0, 0)),
                # scale-folded weights of one group; revisited across b and l.
                pl.BlockSpec((None, kh * kw, co_pad, cin_k), lambda b, g, l: (g, 0, 0, 0)),
                # folded BN bias of one group.
                pl.BlockSpec((None, co_pad, 1), lambda b, g, l: (g, 0, 0)),
            ],
            out_specs=pl.BlockSpec((None, None, co_pad, tl), lambda b, g, l: (b, g, 0, l)),
        ),
        compiler_params=pltpu.CompilerParams(
            dimension_semantics=("parallel", "parallel", "parallel"),
            vmem_limit_bytes=32 * 1024 * 1024,   # safe on v5e/v6e/v7x; our tiles are small
        ),
    )(xf, wg, bg)

    # ---- strip padding / garbage columns; result is already channels-first ------
    out = out[..., :l_raw].reshape(n, groups, co_pad, ho, wp)
    out = out[:, :, :cout_g, :, :wo].reshape(n, cout, ho, wo)
    return out


# ------------------------- pure-JAX reference --------------------------------

def _reference(x, weight, gamma, beta, mean, var, *, stride, groups, use_act,
               eps=1e-5):
    pad = (weight.shape[2] - 1) // 2
    y = lax.conv_general_dilated(
        x, weight, window_strides=(stride, stride),
        padding=[(pad, pad), (pad, pad)],
        dimension_numbers=("NCHW", "OIHW", "NCHW"),
        feature_group_count=groups)
    scale = gamma / jnp.sqrt(var + eps)
    bias = beta - mean * scale
    y = y * scale[None, :, None, None] + bias[None, :, None, None]
    if use_act:
        y = jnp.maximum(y, 0.0)
    return y


# --------------------------------- main ---------------------------------------

if __name__ == "__main__":
    # ConvBNAct(in_channels=4, out_channels=8, kernel_size=3, stride=1,
    #           groups=1, use_act=True)
    N, CIN, H, W = 2, 4, 16, 16
    COUT, K, STRIDE, GROUPS, USE_ACT = 8, 3, 1, 1, True

    key = jax.random.PRNGKey(0)
    kx, kw_, kg, kb, km, kv = jax.random.split(key, 6)

    x = jax.random.normal(kx, (N, CIN, H, W), dtype=jnp.float32)
    weight = 0.1 * jax.random.normal(
        kw_, (COUT, CIN // GROUPS, K, K), dtype=jnp.float32)
    gamma = 1.0 + 0.1 * jax.random.normal(kg, (COUT,), dtype=jnp.float32)
    beta = 0.1 * jax.random.normal(kb, (COUT,), dtype=jnp.float32)
    running_mean = 0.1 * jax.random.normal(km, (COUT,), dtype=jnp.float32)
    running_var = jnp.abs(
        1.0 + 0.1 * jax.random.normal(kv, (COUT,), dtype=jnp.float32))

    conv_fn = jax.jit(functools.partial(
        conv_bn_act, stride=STRIDE, groups=GROUPS, use_act=USE_ACT))
    y = jax.block_until_ready(
        conv_fn(x, weight, gamma, beta, running_mean, running_var))

    y_ref = _reference(x, weight, gamma, beta, running_mean, running_var,
                       stride=STRIDE, groups=GROUPS, use_act=USE_ACT)
    assert y.shape == (N, COUT, H, W)
    # bf16 MXU inputs -> tolerance loosened vs. the f32 reference.
    assert bool(jnp.allclose(y, y_ref, atol=2e-2, rtol=2e-2)), \
        float(jnp.max(jnp.abs(y - y_ref)))

    print("KERNEL_OK")
</pallas_src>

<mosaic_0001>
module attributes {stable_mosaic.version = 11 : i64} {
  func.func @_conv_bn_act_kernel(%arg0: i32, %arg1: i32, %arg2: i32, %arg3: memref<1x1x8x512xbf16, #tpu.memory_space<vmem>>, %arg4: memref<1x9x128x8xbf16, #tpu.memory_space<vmem>>, %arg5: memref<1x128x1xf32, #tpu.memory_space<vmem>>, %arg6: memref<1x1x128x384xf32, #tpu.memory_space<vmem>>) attributes {dimension_semantics = [#tpu.dimension_semantics<parallel>, #tpu.dimension_semantics<parallel>, #tpu.dimension_semantics<parallel>], iteration_bounds = array<i64: 2, 1, 1>, scalar_prefetch = 0 : i64, scratch_operands = 0 : i64, tpu.core_type = #tpu.core_type<tc>, window_params = [{transform_indices = @transform_0, window_bounds = array<i64: 1, 1, 8, 512>}, {transform_indices = @transform_1, window_bounds = array<i64: 1, 9, 128, 8>}, {transform_indices = @transform_2, window_bounds = array<i64: 1, 128, 1>}, {transform_indices = @transform_3, window_bounds = array<i64: 1, 1, 128, 384>}]} {
    %c0 = arith.constant 0 : index
    %c0_0 = arith.constant 0 : index
    %c0_1 = arith.constant 0 : index
    %c0_2 = arith.constant 0 : index
    %0 = vector.load %arg3[%c0, %c0_0, %c0_1, %c0_2] : memref<1x1x8x512xbf16, #tpu.memory_space<vmem>>, vector<1x1x8x422xbf16>
    %1 = vector.shape_cast %0 : vector<1x1x8x422xbf16> to vector<8x422xbf16>
    %cst = arith.constant 0.000000e+00 : f32
    %2 = vector.broadcast %cst : f32 to vector<128x384xf32>
    %3 = vector.extract_strided_slice %1 {offsets = [0, 0], sizes = [8, 384], strides = [1, 1]} : vector<8x422xbf16> to vector<8x384xbf16>
    %c0_3 = arith.constant 0 : index
    %c0_4 = arith.constant 0 : index
    %c0_5 = arith.constant 0 : index
    %c0_6 = arith.constant 0 : index
    %4 = vector.load %arg4[%c0_3, %c0_4, %c0_5, %c0_6] : memref<1x9x128x8xbf16, #tpu.memory_space<vmem>>, vector<1x1x128x8xbf16>
    %5 = vector.shape_cast %4 : vector<1x1x128x8xbf16> to vector<128x8xbf16>
    %cst_7 = arith.constant dense<0.000000e+00> : vector<128x384xf32>
    %6 = tpu.matmul %5, %3, %cst_7 {dimension_numbers = #tpu.dot_dimension_numbers<[1], [0], [0], [1], [0, 0, 1, 1], [], []>} : vector<128x8xbf16>, vector<8x384xbf16>, vector<128x384xf32> -> vector<128x384xf32>
    %7 = arith.addf %2, %6 : vector<128x384xf32>
    %8 = vector.extract_strided_slice %1 {offsets = [0, 1], sizes = [8, 384], strides = [1, 1]} : vector<8x422xbf16> to vector<8x384xbf16>
    %c0_8 = arith.constant 0 : index
    %c1 = arith.constant 1 : index
    %c0_9 = arith.constant 0 : index
    %c0_10 = arith.constant 0 : index
    %9 = vector.load %arg4[%c0_8, %c1, %c0_9, %c0_10] : memref<1x9x128x8xbf16, #tpu.memory_space<vmem>>, vector<1x1x128x8xbf16>
    %10 = vector.shape_cast %9 : vector<1x1x128x8xbf16> to vector<128x8xbf16>
    %cst_11 = arith.constant dense<0.000000e+00> : vector<128x384xf32>
    %11 = tpu.matmul %10, %8, %cst_11 {dimension_numbers = #tpu.dot_dimension_numbers<[1], [0], [0], [1], [0, 0, 1, 1], [], []>} : vector<128x8xbf16>, vector<8x384xbf16>, vector<128x384xf32> -> vector<128x384xf32>
    %12 = arith.addf %7, %11 : vector<128x384xf32>
    %13 = vector.extract_strided_slice %1 {offsets = [0, 2], sizes = [8, 384], strides = [1, 1]} : vector<8x422xbf16> to vector<8x384xbf16>
    %c0_12 = arith.constant 0 : index
    %c2 = arith.constant 2 : index
    %c0_13 = arith.constant 0 : index
    %c0_14 = arith.constant 0 : index
    %14 = vector.load %arg4[%c0_12, %c2, %c0_13, %c0_14] : memref<1x9x128x8xbf16, #tpu.memory_space<vmem>>, vector<1x1x128x8xbf16>
    %15 = vector.shape_cast %14 : vector<1x1x128x8xbf16> to vector<128x8xbf16>
    %cst_15 = arith.constant dense<0.000000e+00> : vector<128x384xf32>
    %16 = tpu.matmul %15, %13, %cst_15 {dimension_numbers = #tpu.dot_dimension_numbers<[1], [0], [0], [1], [0, 0, 1, 1], [], []>} : vector<128x8xbf16>, vector<8x384xbf16>, vector<128x384xf32> -> vector<128x384xf32>
    %17 = arith.addf %12, %16 : vector<128x384xf32>
    %18 = vector.extract_strided_slice %1 {offsets = [0, 18], sizes = [8, 384], strides = [1, 1]} : vector<8x422xbf16> to vector<8x384xbf16>
    %c0_16 = arith.constant 0 : index
    %c3 = arith.constant 3 : index
    %c0_17 = arith.constant 0 : index
    %c0_18 = arith.constant 0 : index
    %19 = vector.load %arg4[%c0_16, %c3, %c0_17, %c0_18] : memref<1x9x128x8xbf16, #tpu.memory_space<vmem>>, vector<1x1x128x8xbf16>
    %20 = vector.shape_cast %19 : vector<1x1x128x8xbf16> to vector<128x8xbf16>
    %cst_19 = arith.constant dense<0.000000e+00> : vector<128x384xf32>
    %21 = tpu.matmul %20, %18, %cst_19 {dimension_numbers = #tpu.dot_dimension_numbers<[1], [0], [0], [1], [0, 0, 1, 1], [], []>} : vector<128x8xbf16>, vector<8x384xbf16>, vector<128x384xf32> -> vector<128x384xf32>
    %22 = arith.addf %17, %21 : vector<128x384xf32>
    %23 = vector.extract_strided_slice %1 {offsets = [0, 19], sizes = [8, 384], strides = [1, 1]} : vector<8x422xbf16> to vector<8x384xbf16>
    %c0_20 = arith.constant 0 : index
    %c4 = arith.constant 4 : index
    %c0_21 = arith.constant 0 : index
    %c0_22 = arith.constant 0 : index
    %24 = vector.load %arg4[%c0_20, %c4, %c0_21, %c0_22] : memref<1x9x128x8xbf16, #tpu.memory_space<vmem>>, vector<1x1x128x8xbf16>
    %25 = vector.shape_cast %24 : vector<1x1x128x8xbf16> to vector<128x8xbf16>
    %cst_23 = arith.constant dense<0.000000e+00> : vector<128x384xf32>
    %26 = tpu.matmul %25, %23, %cst_23 {dimension_numbers = #tpu.dot_dimension_numbers<[1], [0], [0], [1], [0, 0, 1, 1], [], []>} : vector<128x8xbf16>, vector<8x384xbf16>, vector<128x384xf32> -> vector<128x384xf32>
    %27 = arith.addf %22, %26 : vector<128x384xf32>
    %28 = vector.extract_strided_slice %1 {offsets = [0, 20], sizes = [8, 384], strides = [1, 1]} : vector<8x422xbf16> to vector<8x384xbf16>
    %c0_24 = arith.constant 0 : index
    %c5 = arith.constant 5 : index
    %c0_25 = arith.constant 0 : index
    %c0_26 = arith.constant 0 : index
    %29 = vector.load %arg4[%c0_24, %c5, %c0_25, %c0_26] : memref<1x9x128x8xbf16, #tpu.memory_space<vmem>>, vector<1x1x128x8xbf16>
    %30 = vector.shape_cast %29 : vector<1x1x128x8xbf16> to vector<128x8xbf16>
    %cst_27 = arith.constant dense<0.000000e+00> : vector<128x384xf32>
    %31 = tpu.matmul %30, %28, %cst_27 {dimension_numbers = #tpu.dot_dimension_numbers<[1], [0], [0], [1], [0, 0, 1, 1], [], []>} : vector<128x8xbf16>, vector<8x384xbf16>, vector<128x384xf32> -> vector<128x384xf32>
    %32 = arith.addf %27, %31 : vector<128x384xf32>
    %33 = vector.extract_strided_slice %1 {offsets = [0, 36], sizes = [8, 384], strides = [1, 1]} : vector<8x422xbf16> to vector<8x384xbf16>
    %c0_28 = arith.constant 0 : index
    %c6 = arith.constant 6 : index
    %c0_29 = arith.constant 0 : index
    %c0_30 = arith.constant 0 : index
    %34 = vector.load %arg4[%c0_28, %c6, %c0_29, %c0_30] : memref<1x9x128x8xbf16, #tpu.memory_space<vmem>>, vector<1x1x128x8xbf16>
    %35 = vector.shape_cast %34 : vector<1x1x128x8xbf16> to vector<128x8xbf16>
    %cst_31 = arith.constant dense<0.000000e+00> : vector<128x384xf32>
    %36 = tpu.matmul %35, %33, %cst_31 {dimension_numbers = #tpu.dot_dimension_numbers<[1], [0], [0], [1], [0, 0, 1, 1], [], []>} : vector<128x8xbf16>, vector<8x384xbf16>, vector<128x384xf32> -> vector<128x384xf32>
    %37 = arith.addf %32, %36 : vector<128x384xf32>
    %38 = vector.extract_strided_slice %1 {offsets = [0, 37], sizes = [8, 384], strides = [1, 1]} : vector<8x422xbf16> to vector<8x384xbf16>
    %c0_32 = arith.constant 0 : index
    %c7 = arith.constant 7 : index
    %c0_33 = arith.constant 0 : index
    %c0_34 = arith.constant 0 : index
    %39 = vector.load %arg4[%c0_32, %c7, %c0_33, %c0_34] : memref<1x9x128x8xbf16, #tpu.memory_space<vmem>>, vector<1x1x128x8xbf16>
    %40 = vector.shape_cast %39 : vector<1x1x128x8xbf16> to vector<128x8xbf16>
    %cst_35 = arith.constant dense<0.000000e+00> : vector<128x384xf32>
    %41 = tpu.matmul %40, %38, %cst_35 {dimension_numbers = #tpu.dot_dimension_numbers<[1], [0], [0], [1], [0, 0, 1, 1], [], []>} : vector<128x8xbf16>, vector<8x384xbf16>, vector<128x384xf32> -> vector<128x384xf32>
    %42 = arith.addf %37, %41 : vector<128x384xf32>
    %43 = vector.extract_strided_slice %1 {offsets = [0, 38], sizes = [8, 384], strides = [1, 1]} : vector<8x422xbf16> to vector<8x384xbf16>
    %c0_36 = arith.constant 0 : index
    %c8 = arith.constant 8 : index
    %c0_37 = arith.constant 0 : index
    %c0_38 = arith.constant 0 : index
    %44 = vector.load %arg4[%c0_36, %c8, %c0_37, %c0_38] : memref<1x9x128x8xbf16, #tpu.memory_space<vmem>>, vector<1x1x128x8xbf16>
    %45 = vector.shape_cast %44 : vector<1x1x128x8xbf16> to vector<128x8xbf16>
    %cst_39 = arith.constant dense<0.000000e+00> : vector<128x384xf32>
    %46 = tpu.matmul %45, %43, %cst_39 {dimension_numbers = #tpu.dot_dimension_numbers<[1], [0], [0], [1], [0, 0, 1, 1], [], []>} : vector<128x8xbf16>, vector<8x384xbf16>, vector<128x384xf32> -> vector<128x384xf32>
    %47 = arith.addf %42, %46 : vector<128x384xf32>
    %c0_40 = arith.constant 0 : index
    %c0_41 = arith.constant 0 : index
    %c0_42 = arith.constant 0 : index
    %48 = vector.load %arg5[%c0_40, %c0_41, %c0_42] : memref<1x128x1xf32, #tpu.memory_space<vmem>>, vector<1x128x1xf32>
    %49 = vector.shape_cast %48 : vector<1x128x1xf32> to vector<128x1xf32>
    %50 = vector.broadcast %49 : vector<128x1xf32> to vector<128x384xf32>
    %51 = arith.addf %47, %50 : vector<128x384xf32>
    %cst_43 = arith.constant 0.000000e+00 : f32
    %52 = vector.broadcast %cst_43 : f32 to vector<128x384xf32>
    %53 = arith.maximumf %51, %52 : vector<128x384xf32>
    %c0_44 = arith.constant 0 : index
    %c0_45 = arith.constant 0 : index
    %c0_46 = arith.constant 0 : index
    %c0_47 = arith.constant 0 : index
    %54 = vector.load %arg6[%c0_44, %c0_45, %c0_46, %c0_47] : memref<1x1x128x384xf32, #tpu.memory_space<vmem>>, vector<1x1x128x384xf32>
    %55 = vector.shape_cast %54 : vector<1x1x128x384xf32> to vector<128x384xf32>
    %56 = vector.shape_cast %53 : vector<128x384xf32> to vector<1x1x128x384xf32>
    tpu.vector_store %arg6[%c0_44, %c0_45, %c0_46, %c0_47], %56 {strides = array<i32>} : memref<1x1x128x384xf32, #tpu.memory_space<vmem>>, vector<1x1x128x384xf32>,
    return
  }
  func.func @transform_0(%arg0: i32, %arg1: i32, %arg2: i32) -> (i32, i32, i32, i32) {
    %c0_i32 = arith.constant 0 : i32
    %c0_i32_0 = arith.constant 0 : i32
    %c0_i32_1 = arith.constant 0 : i32
    return %arg0, %arg1, %c0_i32, %c0_i32_0 : i32, i32, i32, i32
  }
  func.func @transform_1(%arg0: i32, %arg1: i32, %arg2: i32) -> (i32, i32, i32, i32) {
    %c0_i32 = arith.constant 0 : i32
    %c0_i32_0 = arith.constant 0 : i32
    %c0_i32_1 = arith.constant 0 : i32
    %c0_i32_2 = arith.constant 0 : i32
    return %arg1, %c0_i32, %c0_i32_0, %c0_i32_1 : i32, i32, i32, i32
  }
  func.func @transform_2(%arg0: i32, %arg1: i32, %arg2: i32) -> (i32, i32, i32) {
    %c0_i32 = arith.constant 0 : i32
    %c0_i32_0 = arith.constant 0 : i32
    %c0_i32_1 = arith.constant 0 : i32
    return %arg1, %c0_i32, %c0_i32_0 : i32, i32, i32
  }
  func.func @transform_3(%arg0: i32, %arg1: i32, %arg2: i32) -> (i32, i32, i32, i32) {
    %c0_i32 = arith.constant 0 : i32
    %c0_i32_0 = arith.constant 0 : i32
    return %arg0, %arg1, %c0_i32, %arg2 : i32, i32, i32, i32
  }
}

</mosaic_0001>

<llo_original>
// kernel: conv_bn_act.1
$region0: #{conv_bn_act.1}
  #allocation0 [shape = 'u32[]', space=smem, size = 0x4, offset = 0x4, fixed_abs, tag = 'smem constant byte address 0x4 - core index']
  #allocation1 [shape = 'u32[72,128]{1,0:T(1,128)}', space=vmem, size = 0x9000, scoped, tag = 'internal scratch']
  %s0 = inlined_call_operand.vmem [shape: bf16[2,1,8,512], index: 0, kind: input, shape index: {}]
  %s1 = inlined_call_operand.vmem [shape: bf16[1,9,128,8], index: 1, kind: input, shape index: {}]
  %s2 = inlined_call_operand.vmem [shape: f32[1,128,1], index: 2, kind: input, shape index: {}]
  %s3 = inlined_call_operand.vmem [shape: f32[2,1,128,384], index: 3, kind: output, shape index: {}]
  %s4 = sld [smem:[#allocation0]]
  $region45: #{conv_bn_act.1} parent=0
    _
  %s6 = ssub.s32 1, %s4
  %s7 = scalar_select 0, %s6, %s4
  loop: start=0, step=1, limit=4
  $region2: #{conv_bn_act.1} parent=0 // loop_pre_header
    _
  $region3: #{conv_bn_act.1} parent=0 // loop_header
    %s9 = sphi 0, %s13
    %p10 = scmp.ge.s32.totalorder %s9, 4
    %s16 = sphi 0, %s35
    %s17 = sphi 0, %s31
    %s18 = sphi 0, %s27
    %s19 = sphi 0, %s16
    %s20 = sphi 0, %s17
    %s21 = sphi 0, %s18
    %s22 = sphi 0, %s19
    %s23 = sphi 0, %s20
    %s24 = sphi 0, %s21
    %s40 = sphi 0, %s42
    %s43 = sphi 0, %s40
    %s44 = sphi 0, %s43
    %s60 = sphi 0, %s44
    %s66 = sphi 0, %s68
    %s69 = sphi 0, %s66
    %s70 = sphi 0, %s69
    %s86 = sphi 0, %s70
    %s92 = sphi 0, %s94
    %s95 = sphi 0, %s92
    %s96 = sphi 0, %s95
    %s112 = sphi 0, %s96
    %s122 = sphi 0, %s124
    %s125 = sphi 0, %s122
    %s126 = sphi 0, %s125
    %s142 = sphi 0, %s126
  $region4: #{conv_bn_act.1} parent=0 // loop_header_branch
    %12 = sbr.rel (%p10) target = $region8
  $region5: #{conv_bn_act.1} parent=0 // loop_body
    %s14 = ssub.s32 %s9, 1
    %s15 = ssub.s32 %s9, 2
    %s25 = sadd.s32 1, %s18
    %p26 = scmp.ge.s32.totalorder %s25, 1
    %s27 = scalar_select %p26, 0, %s25
    %s28 = sadd.s32 1, %s17
    %s29 = scalar_select %p26, %s28, %s17
    %p30 = scmp.ge.s32.totalorder %s29, 1
    %s31 = scalar_select %p30, 0, %s29
    %s32 = sadd.s32 1, %s16
    %s33 = scalar_select %p30, %s32, %s16
    %p34 = scmp.ge.s32.totalorder %s33, 2
    %s35 = scalar_select %p34, 0, %s33
    %s36 = ssub.s32 %s16, %s35
    %s37 = ssub.s32 %s17, %s31
    %s38 = sor.u32 %s36, %s37
    %p39 = scmp.eq.s32.totalorder %s38, 0
    %s41 = sadd.s32 %s40, 1
    %s42 = scalar_select %p39, %s40, %s41
    %p45 = pneg %p39
    %p46 = scmp.eq.s32.totalorder %s9, 1
    %p47 = por %p45, %p46
    %p48 = scmp.ne.s32.totalorder %s40, %s43
    %p49 = scmp.eq.s32.totalorder %s9, 0
    %p50 = por %p48, %p49
    %p51 = scmp.ne.s32.totalorder %s40, %s43
    %p52 = scmp.eq.s32.totalorder %s14, 1
    %p53 = por %p51, %p52
    %p54 = scmp.ne.s32.totalorder %s43, %s44
    %p55 = scmp.eq.s32.totalorder %s14, 0
    %p56 = por %p54, %p55
    %p57 = scmp.ne.s32.totalorder %s43, %s44
    %p58 = scmp.eq.s32.totalorder %s15, 1
    %p59 = por %p57, %p58
    %p61 = scmp.ne.s32.totalorder %s44, %s60
    %p62 = scmp.eq.s32.totalorder %s15, 0
    %p63 = por %p61, %p62
    %s64 = ssub.s32 %s17, %s31
    %p65 = scmp.eq.s32.totalorder %s64, 0
    %s67 = sadd.s32 %s66, 1
    %s68 = scalar_select %p65, %s66, %s67
    %p71 = pneg %p65
    %p72 = scmp.eq.s32.totalorder %s9, 1
    %p73 = por %p71, %p72
    %p74 = scmp.ne.s32.totalorder %s66, %s69
    %p75 = scmp.eq.s32.totalorder %s9, 0
    %p76 = por %p74, %p75
    %p77 = scmp.ne.s32.totalorder %s66, %s69
    %p78 = scmp.eq.s32.totalorder %s14, 1
    %p79 = por %p77, %p78
    %p80 = scmp.ne.s32.totalorder %s69, %s70
    %p81 = scmp.eq.s32.totalorder %s14, 0
    %p82 = por %p80, %p81
    %p83 = scmp.ne.s32.totalorder %s69, %s70
    %p84 = scmp.eq.s32.totalorder %s15, 1
    %p85 = por %p83, %p84
    %p87 = scmp.ne.s32.totalorder %s70, %s86
    %p88 = scmp.eq.s32.totalorder %s15, 0
    %p89 = por %p87, %p88
    %s90 = ssub.s32 %s17, %s31
    %p91 = scmp.eq.s32.totalorder %s90, 0
    %s93 = sadd.s32 %s92, 1
    %s94 = scalar_select %p91, %s92, %s93
    %p97 = pneg %p91
    %p98 = scmp.eq.s32.totalorder %s9, 1
    %p99 = por %p97, %p98
    %p100 = scmp.ne.s32.totalorder %s92, %s95
    %p101 = scmp.eq.s32.totalorder %s9, 0
    %p102 = por %p100, %p101
    %p103 = scmp.ne.s32.totalorder %s92, %s95
    %p104 = scmp.eq.s32.totalorder %s14, 1
    %p105 = por %p103, %p104
    %p106 = scmp.ne.s32.totalorder %s95, %s96
    %p107 = scmp.eq.s32.totalorder %s14, 0
    %p108 = por %p106, %p107
    %p109 = scmp.ne.s32.totalorder %s95, %s96
    %p110 = scmp.eq.s32.totalorder %s15, 1
    %p111 = por %p109, %p110
    %p113 = scmp.ne.s32.totalorder %s96, %s112
    %p114 = scmp.eq.s32.totalorder %s15, 0
    %p115 = por %p113, %p114
    %s116 = ssub.s32 %s16, %s35
    %s117 = ssub.s32 %s17, %s31
    %s118 = sor.u32 %s116, %s117
    %s119 = ssub.s32 %s18, %s27
    %s120 = sor.u32 %s118, %s119
    %p121 = scmp.eq.s32.totalorder %s120, 0
    %s123 = sadd.s32 %s122, 1
    %s124 = scalar_select %p121, %s122, %s123
    %p127 = pneg %p121
    %p128 = scmp.eq.s32.totalorder %s9, 1
    %p129 = por %p127, %p128
    %p130 = scmp.ne.s32.totalorder %s122, %s125
    %p131 = scmp.eq.s32.totalorder %s9, 0
    %p132 = por %p130, %p131
    %p133 = scmp.ne.s32.totalorder %s122, %s125
    %p134 = scmp.eq.s32.totalorder %s14, 1
    %p135 = por %p133, %p134
    %p136 = scmp.ne.s32.totalorder %s125, %s126
    %p137 = scmp.eq.s32.totalorder %s14, 0
    %p138 = por %p136, %p137
    %p139 = scmp.ne.s32.totalorder %s125, %s126
    %p140 = scmp.eq.s32.totalorder %s15, 1
    %p141 = por %p139, %p140
    %p143 = scmp.ne.s32.totalorder %s126, %s142
    %p144 = scmp.eq.s32.totalorder %s15, 0
    %p145 = por %p143, %p144
    %p146 = scmp.le.s32.totalorder 1, %s9
    %p147 = scmp.lt.s32.totalorder %s9, 3
    %p148 = pnand %p146, %p147
    %p149 = pneg %p148
    // Predicated region
    $region9: #{conv_bn_act.1} parent=5 // pred_check
      _
    $region10: #{conv_bn_act.1} parent=5 // pred_check_branch
      %151 = sbr.rel (%p148) target = $region12
    $region11: #{conv_bn_act.1} parent=5 // pred_region
      %s152 = ssub.s32 %s9, 1
      // Predicated region
      $region13: #{conv_bn_act.1} parent=11 // pred_check
        %p153 = pneg %p82
      $region14: #{conv_bn_act.1} parent=11 // pred_check_branch
        %155 = sbr.rel (%p153) target = $region16
      $region15: #{conv_bn_act.1} parent=11 // pred_region
        %p156 = scmp.lt.s32.totalorder %s20, 0
        %s157 = scalar_select %p156, %s20, 0
        %s158 = smul.addr %s157, 144
        %s159 = smul.addr %s158, 4
        %s160 = scalar_lea.vmem %s1, %s159
      $region16: #{conv_bn_act.1} parent=11 // pred_fallthru
        _
      // Predicated region
      $region17: #{conv_bn_act.1} parent=11 // pred_check
        %p161 = pneg %p108
      $region18: #{conv_bn_act.1} parent=11 // pred_check_branch
        %163 = sbr.rel (%p161) target = $region20
      $region19: #{conv_bn_act.1} parent=11 // pred_region
        %p164 = scmp.lt.s32.totalorder %s20, 0
        %s165 = scalar_select %p164, %s20, 0
        %s166 = smul.addr %s165, 16
        %s167 = smul.addr %s166, 8
        %s168 = scalar_lea.vmem %s2, %s167
      $region20: #{conv_bn_act.1} parent=11 // pred_fallthru
        _
    $region12: #{conv_bn_act.1} parent=5 // pred_fallthru
      _
    %p169 = scmp.lt.s32.totalorder %s9, 2
    // Predicated region
    $region21: #{conv_bn_act.1} parent=5 // pred_check
      %p170 = pneg %p169
    $region22: #{conv_bn_act.1} parent=5 // pred_check_branch
      %172 = sbr.rel (%p170) target = $region24
    $region23: #{conv_bn_act.1} parent=5 // pred_region
      // Predicated region
      $region25: #{conv_bn_act.1} parent=23 // pred_check
        %p173 = pneg %p50
      $region26: #{conv_bn_act.1} parent=23 // pred_check_branch
        %175 = sbr.rel (%p173) target = $region28
      $region27: #{conv_bn_act.1} parent=23 // pred_region
        %p176 = scmp.lt.s32.totalorder %s16, 1
        %s177 = scalar_select %p176, %s16, 1
        %p178 = scmp.lt.s32.totalorder %s17, 0
        %s179 = scalar_select %p178, %s17, 0
        %s180 = smul.addr %s179, 4
        %s181 = smul.addr %s177, 4
        %s182 = sadd.s32 %s180, %s181
        %s183 = smul.addr %s182, 4
        %s184 = scalar_lea.vmem %s0, %s183
      $region28: #{conv_bn_act.1} parent=23 // pred_fallthru
        _
    $region24: #{conv_bn_act.1} parent=5 // pred_fallthru
      _
    %p185 = scmp.le.s32.totalorder 1, %s9
    %p186 = scmp.lt.s32.totalorder %s9, 3
    %p187 = pnand %p185, %p186
    %p188 = pneg %p187
    // Predicated region
    $region29: #{conv_bn_act.1} parent=5 // pred_check
      _
    $region30: #{conv_bn_act.1} parent=5 // pred_check_branch
      %190 = sbr.rel (%p187) target = $region32
    $region31: #{conv_bn_act.1} parent=5 // pred_region
      %s191 = ssub.s32 %s9, 1
      %p192 = scmp.lt.s32.totalorder %s19, 1
      %s193 = scalar_select %p192, %s19, 1
      %p194 = scmp.lt.s32.totalorder %s20, 0
      %s195 = scalar_select %p194, %s20, 0
      %s196 = smul.addr %s195, 4
      %s197 = smul.addr %s193, 4
      %s198 = sadd.s32 %s196, %s197
      %s199 = smul.addr %s198, 4
      %s200 = scalar_lea.vmem %s0, %s199
      %p201 = pneg %p56
      %p202 = pneg %p53
      %p203 = scmp.lt.s32.totalorder %s20, 0
      %s204 = scalar_select %p203, %s20, 0
      %s205 = smul.addr %s204, 144
      %s206 = smul.addr %s205, 4
      %s207 = scalar_lea.vmem %s1, %s206
      %p208 = pneg %p82
      %p209 = pneg %p79
      %p210 = scmp.lt.s32.totalorder %s20, 0
      %s211 = scalar_select %p210, %s20, 0
      %s212 = smul.addr %s211, 16
      %s213 = smul.addr %s212, 8
      %s214 = scalar_lea.vmem %s2, %s213
      %p215 = pneg %p108
      %p216 = pneg %p105
      %p217 = pneg %p138
      %p218 = pneg %p135
      %s219 = smul.u32 3, %s21
      %p220 = scmp.lt.s32.totalorder %s19, 1
      %s221 = scalar_select %p220, %s19, 1
      %p222 = scmp.lt.s32.totalorder %s20, 0
      %s223 = scalar_select %p222, %s20, 0
      %p224 = scmp.lt.s32.totalorder %s219, 2
      %s225 = scalar_select %p224, %s219, 2
      %s226 = smul.addr %s223, 48
      %s227 = sadd.s32 %s225, %s226
      %s228 = smul.addr %s221, 48
      %s229 = sadd.s32 %s227, %s228
      %s230 = smul.addr %s229, 8
      %s231 = scalar_lea.vmem %s3, %s230
      %p232 = scmp.lt.s32.totalorder %s19, 1
      %s233 = scalar_select %p232, %s19, 1
      %p234 = scmp.lt.s32.totalorder %s20, 0
      %s235 = scalar_select %p234, %s20, 0
      %s236 = smul.addr %s235, 4
      %s237 = smul.addr %s233, 4
      %s238 = sadd.s32 %s236, %s237
      %s239 = smul.addr %s238, 4
      %s240 = scalar_lea.vmem %s0, %s239
      %p241 = scmp.lt.s32.totalorder %s20, 0
      %s242 = scalar_select %p241, %s20, 0
      %s243 = smul.addr %s242, 144
      %s244 = smul.addr %s243, 4
      %s245 = scalar_lea.vmem %s1, %s244
      %p246 = scmp.lt.s32.totalorder %s20, 0
      %s247 = scalar_select %p246, %s20, 0
      %s248 = smul.addr %s247, 16
      %s249 = smul.addr %s248, 8
      %s250 = scalar_lea.vmem %s2, %s249
      %s251 = smul.u32 3, %s21
      %p252 = scmp.lt.s32.totalorder %s19, 1
      %s253 = scalar_select %p252, %s19, 1
      %p254 = scmp.lt.s32.totalorder %s20, 0
      %s255 = scalar_select %p254, %s20, 0
      %p256 = scmp.lt.s32.totalorder %s251, 2
      %s257 = scalar_select %p256, %s251, 2
      %s258 = smul.addr %s255, 48
      %s259 = sadd.s32 %s257, %s258
      %s260 = smul.addr %s253, 48
      %s261 = sadd.s32 %s259, %s260
      %s262 = smul.addr %s261, 8
      %s263 = scalar_lea.vmem %s3, %s262
      %s264 = smul.u32 3, %s21
      %v266 = vld [vmem:[%s240] sm:$0xff]
      %v267 = vld [vmem:[%s240 + $0x8] sm:$0xff]
      %v268 = vld [vmem:[%s245] sm:$0xf]
      %v269 = vld [vmem:[%s245 + $0x4] sm:$0xf]
      %v270 = vld [vmem:[%s245 + $0x8] sm:$0xf]
      %v271 = vld [vmem:[%s245 + $0xc] sm:$0xf]
      %v272 = vld [vmem:[%s245 + $0x10] sm:$0xf]
      %v273 = vld [vmem:[%s245 + $0x14] sm:$0xf]
      %v274 = vld [vmem:[%s245 + $0x18] sm:$0xf]
      %v275 = vld [vmem:[%s245 + $0x1c] sm:$0xf]
      %v276 = vld [vmem:[%s245 + $0x20] sm:$0xf]
      %v277 = vld [vmem:[%s245 + $0x24] sm:$0xf]
      %v278 = vld [vmem:[%s245 + $0x28] sm:$0xf]
      %v279 = vld [vmem:[%s245 + $0x2c] sm:$0xf]
      %v280 = vld [vmem:[%s245 + $0x30] sm:$0xf]
      %v281 = vld [vmem:[%s245 + $0x34] sm:$0xf]
      %v282 = vld [vmem:[%s245 + $0x38] sm:$0xf]
      %v283 = vld [vmem:[%s245 + $0x3c] sm:$0xf]
      %s284 = scalar_lea.vmem %s245, 64
      %v285 = vld [vmem:[%s284] sm:$0xf]
      %v286 = vld [vmem:[%s284 + $0x4] sm:$0xf]
      %v287 = vld [vmem:[%s284 + $0x8] sm:$0xf]
      %v288 = vld [vmem:[%s284 + $0xc] sm:$0xf]
      %v289 = vld [vmem:[%s284 + $0x10] sm:$0xf]
      %v290 = vld [vmem:[%s284 + $0x14] sm:$0xf]
      %v291 = vld [vmem:[%s284 + $0x18] sm:$0xf]
      %v292 = vld [vmem:[%s284 + $0x1c] sm:$0xf]
      %v293 = vld [vmem:[%s284 + $0x20] sm:$0xf]
      %v294 = vld [vmem:[%s284 + $0x24] sm:$0xf]
      %v295 = vld [vmem:[%s284 + $0x28] sm:$0xf]
      %v296 = vld [vmem:[%s284 + $0x2c] sm:$0xf]
      %v297 = vld [vmem:[%s284 + $0x30] sm:$0xf]
      %v298 = vld [vmem:[%s284 + $0x34] sm:$0xf]
      %v299 = vld [vmem:[%s284 + $0x38] sm:$0xf]
      %v300 = vld [vmem:[%s284 + $0x3c] sm:$0xf]
      %v317 = vunpack.c.l.b16 %v285
      %v318 = vunpack.c.l.b16 %v286
      %v319 = vunpack.c.l.b16 %v287
      %v320 = vunpack.c.l.b16 %v288
      %v321 = vunpack.c.l.b16 %v289
      %v322 = vunpack.c.l.b16 %v290
      %v323 = vunpack.c.l.b16 %v291
      %v324 = vunpack.c.l.b16 %v292
      %v325 = vunpack.c.l.b16 %v293
      %v326 = vunpack.c.l.b16 %v294
      %v327 = vunpack.c.l.b16 %v295
      %v328 = vunpack.c.l.b16 %v296
      %v329 = vunpack.c.l.b16 %v297
      %v330 = vunpack.c.l.b16 %v298
      %v331 = vunpack.c.l.b16 %v299
      %v332 = vunpack.c.l.b16 %v300
      %v333 = vpack.c.b16 %v318, %v317
      %v334 = vpack.c.b16 %v320, %v319
      %v335 = vpack.c.b16 %v322, %v321
      %v336 = vpack.c.b16 %v324, %v323
      %v337 = vpack.c.b16 %v326, %v325
      %v338 = vpack.c.b16 %v328, %v327
      %v339 = vpack.c.b16 %v330, %v329
      %v340 = vpack.c.b16 %v332, %v331
      %v343 = vunpack.c.l.b16 %v266
      %v344 = vunpack.c.h.b16 %v266
      %v345 = vunpack.c.l.b16 %v267
      %v346 = vunpack.c.h.b16 %v267
      %v347 = vpack.c.b16 %v343, %v343
      %v348 = vpack.c.b16 %v344, %v344
      %v349 = vpack.c.b16 %v345, %v345
      %v350 = vpack.c.b16 %v346, %v346
      %351 = vrot.lane.b32.xlu0 %v347, 127
      %v352 = vpop.permute.xlu0 %351
      %353 = vrot.lane.b32.xlu0 %v348, 127
      %v354 = vpop.permute.xlu0 %353
      %355 = vrot.lane.b32.xlu0 %v349, 127
      %v356 = vpop.permute.xlu0 %355
      %357 = vrot.lane.b32.xlu0 %v350, 127
      %v358 = vpop.permute.xlu0 %357
      %vm359 = vcmask 1039360
      %v360 = vsel %vm359, %v352, %v354
      %v361 = vsel %vm359, %v354, %v356
      %v362 = vsel %vm359, %v356, %v358
      %vm363 = vcmask 64512
      %v365 = vsel %vm363, %v333, 0
      %v368 = vsel %vm363, %v334, 0
      %v371 = vsel %vm363, %v335, 0
      %v374 = vsel %vm363, %v336, 0
      %v377 = vsel %vm363, %v337, 0
      %v380 = vsel %vm363, %v338, 0
      %v383 = vsel %vm363, %v339, 0
      %v386 = vsel %vm363, %v340, 0
      %vm388 = vcmask 1043456
      %v390 = vsel %vm388, %v360, 0
      %v393 = vsel %vm388, %v361, 0
      %v396 = vsel %vm388, %v362, 0
      %398 = vmatpush.bf16.msra.mxu0 0
      %399 = vmatpush.bf16.msra.mxu0 0
      %400 = vmatpush.bf16.msra.mxu0 0
      %401 = vmatpush.bf16.msra.mxu0 0
      %402 = vmatpush.bf16.msra.mxu0 0
      %403 = vmatpush.bf16.msra.mxu0 0
      %404 = vmatpush.bf16.msra.mxu0 0
      %405 = vmatpush.bf16.msra.mxu0 %v390
      %406 = vmatmul.bf16.gmra.mxu0 %v365
      %v407 = vpop.f32.mrf.mxu0
      %v408 = vadd.f32 0.0, %v407
      %v409 = vpop.f32.mrf.mxu0
      %v410 = vadd.f32 0.0, %v409
      %411 = vmatmul.bf16.gmra.mxu0 %v368
      %v412 = vpop.f32.mrf.mxu0
      %v413 = vadd.f32 0.0, %v412
      %v414 = vpop.f32.mrf.mxu0
      %v415 = vadd.f32 0.0, %v414
      %416 = vmatmul.bf16.gmra.mxu0 %v371
      %v417 = vpop.f32.mrf.mxu0
      %v418 = vadd.f32 0.0, %v417
      %v419 = vpop.f32.mrf.mxu0
      %v420 = vadd.f32 0.0, %v419
      %421 = vmatmul.bf16.gmra.mxu0 %v374
      %v422 = vpop.f32.mrf.mxu0
      %v423 = vadd.f32 0.0, %v422
      %v424 = vpop.f32.mrf.mxu0
      %v425 = vadd.f32 0.0, %v424
      %426 = vmatmul.bf16.gmra.mxu0 %v377
      %v427 = vpop.f32.mrf.mxu0
      %v428 = vadd.f32 0.0, %v427
      %v429 = vpop.f32.mrf.mxu0
      %v430 = vadd.f32 0.0, %v429
      %431 = vmatmul.bf16.gmra.mxu0 %v380
      %v432 = vpop.f32.mrf.mxu0
      %v433 = vadd.f32 0.0, %v432
      %v434 = vpop.f32.mrf.mxu0
      %v435 = vadd.f32 0.0, %v434
      %436 = vmatmul.bf16.gmra.mxu0 %v383
      %v437 = vpop.f32.mrf.mxu0
      %v438 = vadd.f32 0.0, %v437
      %v439 = vpop.f32.mrf.mxu0
      %v440 = vadd.f32 0.0, %v439
      %441 = vmatmul.bf16.gmra.mxu0 %v386
      %v442 = vpop.f32.mrf.mxu0
      %v443 = vadd.f32 0.0, %v442
      %v444 = vpop.f32.mrf.mxu0
      %v445 = vadd.f32 0.0, %v444
      %446 = vdwg.mxu0
      %447 = vmatpush.bf16.msra.mxu0 0
      %448 = vmatpush.bf16.msra.mxu0 0
      %449 = vmatpush.bf16.msra.mxu0 0
      %450 = vmatpush.bf16.msra.mxu0 0
      %451 = vmatpush.bf16.msra.mxu0 0
      %452 = vmatpush.bf16.msra.mxu0 0
      %453 = vmatpush.bf16.msra.mxu0 0
      %454 = vmatpush.bf16.msra.mxu0 %v393
      %455 = vmatmul.bf16.gmra.mxu0 %v365
      %v456 = vpop.f32.mrf.mxu0
      %v457 = vadd.f32 0.0, %v456
      %v458 = vpop.f32.mrf.mxu0
      %v459 = vadd.f32 0.0, %v458
      %460 = vmatmul.bf16.gmra.mxu0 %v368
      %v461 = vpop.f32.mrf.mxu0
      %v462 = vadd.f32 0.0, %v461
      %v463 = vpop.f32.mrf.mxu0
      %v464 = vadd.f32 0.0, %v463
      %465 = vmatmul.bf16.gmra.mxu0 %v371
      %v466 = vpop.f32.mrf.mxu0
      %v467 = vadd.f32 0.0, %v466
      %v468 = vpop.f32.mrf.mxu0
      %v469 = vadd.f32 0.0, %v468
      %470 = vmatmul.bf16.gmra.mxu0 %v374
      %v471 = vpop.f32.mrf.mxu0
      %v472 = vadd.f32 0.0, %v471
      %v473 = vpop.f32.mrf.mxu0
      %v474 = vadd.f32 0.0, %v473
      %475 = vmatmul.bf16.gmra.mxu0 %v377
      %v476 = vpop.f32.mrf.mxu0
      %v477 = vadd.f32 0.0, %v476
      %v478 = vpop.f32.mrf.mxu0
      %v479 = vadd.f32 0.0, %v478
      %480 = vmatmul.bf16.gmra.mxu0 %v380
      %v481 = vpop.f32.mrf.mxu0
      %v482 = vadd.f32 0.0, %v481
      %v483 = vpop.f32.mrf.mxu0
      %v484 = vadd.f32 0.0, %v483
      %485 = vmatmul.bf16.gmra.mxu0 %v383
      %v486 = vpop.f32.mrf.mxu0
      %v487 = vadd.f32 0.0, %v486
      %v488 = vpop.f32.mrf.mxu0
      %v489 = vadd.f32 0.0, %v488
      %490 = vmatmul.bf16.gmra.mxu0 %v386
      %v491 = vpop.f32.mrf.mxu0
      %v492 = vadd.f32 0.0, %v491
      %v493 = vpop.f32.mrf.mxu0
      %v494 = vadd.f32 0.0, %v493
      %495 = vdwg.mxu0
      %496 = vmatpush.bf16.msra.mxu0 0
      %497 = vmatpush.bf16.msra.mxu0 0
      %498 = vmatpush.bf16.msra.mxu0 0
      %499 = vmatpush.bf16.msra.mxu0 0
      %500 = vmatpush.bf16.msra.mxu0 0
      %501 = vmatpush.bf16.msra.mxu0 0
      %502 = vmatpush.bf16.msra.mxu0 0
      %503 = vmatpush.bf16.msra.mxu0 %v396
      %504 = vmatmul.bf16.gmra.mxu0 %v365
      %v505 = vpop.f32.mrf.mxu0
      %v506 = vadd.f32 0.0, %v505
      %v507 = vpop.f32.mrf.mxu0
      %v508 = vadd.f32 0.0, %v507
      %509 = vmatmul.bf16.gmra.mxu0 %v368
      %v510 = vpop.f32.mrf.mxu0
      %v511 = vadd.f32 0.0, %v510
      %v512 = vpop.f32.mrf.mxu0
      %v513 = vadd.f32 0.0, %v512
      %514 = vmatmul.bf16.gmra.mxu0 %v371
      %v515 = vpop.f32.mrf.mxu0
      %v516 = vadd.f32 0.0, %v515
      %v517 = vpop.f32.mrf.mxu0
      %v518 = vadd.f32 0.0, %v517
      %519 = vmatmul.bf16.gmra.mxu0 %v374
      %v520 = vpop.f32.mrf.mxu0
      %v521 = vadd.f32 0.0, %v520
      %v522 = vpop.f32.mrf.mxu0
      %v523 = vadd.f32 0.0, %v522
      %524 = vmatmul.bf16.gmra.mxu0 %v377
      %v525 = vpop.f32.mrf.mxu0
      %v526 = vadd.f32 0.0, %v525
      %v527 = vpop.f32.mrf.mxu0
      %v528 = vadd.f32 0.0, %v527
      %529 = vmatmul.bf16.gmra.mxu0 %v380
      %v530 = vpop.f32.mrf.mxu0
      %v531 = vadd.f32 0.0, %v530
      %v532 = vpop.f32.mrf.mxu0
      %v533 = vadd.f32 0.0, %v532
      %534 = vmatmul.bf16.gmra.mxu0 %v383
      %v535 = vpop.f32.mrf.mxu0
      %v536 = vadd.f32 0.0, %v535
      %v537 = vpop.f32.mrf.mxu0
      %v538 = vadd.f32 0.0, %v537
      %539 = vmatmul.bf16.gmra.mxu0 %v386
      %v540 = vpop.f32.mrf.mxu0
      %v541 = vadd.f32 0.0, %v540
      %v542 = vpop.f32.mrf.mxu0
      %v543 = vadd.f32 0.0, %v542
      %544 = vdwg.mxu0
      %v561 = vunpack.c.l.b16 %v268
      %v562 = vunpack.c.l.b16 %v269
      %v563 = vunpack.c.l.b16 %v270
      %v564 = vunpack.c.l.b16 %v271
      %v565 = vunpack.c.l.b16 %v272
      %v566 = vunpack.c.l.b16 %v273
      %v567 = vunpack.c.l.b16 %v274
      %v568 = vunpack.c.l.b16 %v275
      %v569 = vunpack.c.l.b16 %v276
      %v570 = vunpack.c.l.b16 %v277
      %v571 = vunpack.c.l.b16 %v278
      %v572 = vunpack.c.l.b16 %v279
      %v573 = vunpack.c.l.b16 %v280
      %v574 = vunpack.c.l.b16 %v281
      %v575 = vunpack.c.l.b16 %v282
      %v576 = vunpack.c.l.b16 %v283
      %v577 = vpack.c.b16 %v562, %v561
      %v578 = vpack.c.b16 %v564, %v563
      %v579 = vpack.c.b16 %v566, %v565
      %v580 = vpack.c.b16 %v568, %v567
      %v581 = vpack.c.b16 %v570, %v569
      %v582 = vpack.c.b16 %v572, %v571
      %v583 = vpack.c.b16 %v574, %v573
      %v584 = vpack.c.b16 %v576, %v575
      %v586 = vsel %vm363, %v577, 0
      %v589 = vsel %vm363, %v578, 0
      %v592 = vsel %vm363, %v579, 0
      %v595 = vsel %vm363, %v580, 0
      %v598 = vsel %vm363, %v581, 0
      %v601 = vsel %vm363, %v582, 0
      %v604 = vsel %vm363, %v583, 0
      %v607 = vsel %vm363, %v584, 0
      %v610 = vsel %vm388, %v347, 0
      %v613 = vsel %vm388, %v348, 0
      %v616 = vsel %vm388, %v349, 0
      %618 = vmatpush.bf16.msra.mxu0 0
      %619 = vmatpush.bf16.msra.mxu0 0
      %620 = vmatpush.bf16.msra.mxu0 0
      %621 = vmatpush.bf16.msra.mxu0 0
      %622 = vmatpush.bf16.msra.mxu0 0
      %623 = vmatpush.bf16.msra.mxu0 0
      %624 = vmatpush.bf16.msra.mxu0 0
      %625 = vmatpush.bf16.msra.mxu0 %v610
      %626 = vmatmul.bf16.gmra.mxu0 %v586
      %v627 = vpop.f32.mrf.mxu0
      %v628 = vadd.f32 %v408, %v627
      %v629 = vpop.f32.mrf.mxu0
      %v630 = vadd.f32 %v410, %v629
      %631 = vmatmul.bf16.gmra.mxu0 %v589
      %v632 = vpop.f32.mrf.mxu0
      %v633 = vadd.f32 %v413, %v632
      %v634 = vpop.f32.mrf.mxu0
      %v635 = vadd.f32 %v415, %v634
      %636 = vmatmul.bf16.gmra.mxu0 %v592
      %v637 = vpop.f32.mrf.mxu0
      %v638 = vadd.f32 %v418, %v637
      %v639 = vpop.f32.mrf.mxu0
      %v640 = vadd.f32 %v420, %v639
      %641 = vmatmul.bf16.gmra.mxu0 %v595
      %v642 = vpop.f32.mrf.mxu0
      %v643 = vadd.f32 %v423, %v642
      %v644 = vpop.f32.mrf.mxu0
      %v645 = vadd.f32 %v425, %v644
      %646 = vmatmul.bf16.gmra.mxu0 %v598
      %v647 = vpop.f32.mrf.mxu0
      %v648 = vadd.f32 %v428, %v647
      %v649 = vpop.f32.mrf.mxu0
      %v650 = vadd.f32 %v430, %v649
      %651 = vmatmul.bf16.gmra.mxu0 %v601
      %v652 = vpop.f32.mrf.mxu0
      %v653 = vadd.f32 %v433, %v652
      %v654 = vpop.f32.mrf.mxu0
      %v655 = vadd.f32 %v435, %v654
      %656 = vmatmul.bf16.gmra.mxu0 %v604
      %v657 = vpop.f32.mrf.mxu0
      %v658 = vadd.f32 %v438, %v657
      %v659 = vpop.f32.mrf.mxu0
      %v660 = vadd.f32 %v440, %v659
      %661 = vmatmul.bf16.gmra.mxu0 %v607
      %v662 = vpop.f32.mrf.mxu0
      %v663 = vadd.f32 %v443, %v662
      %v664 = vpop.f32.mrf.mxu0
      %v665 = vadd.f32 %v445, %v664
      %666 = vdwg.mxu0
      %667 = vmatpush.bf16.msra.mxu0 0
      %668 = vmatpush.bf16.msra.mxu0 0
      %669 = vmatpush.bf16.msra.mxu0 0
      %670 = vmatpush.bf16.msra.mxu0 0
      %671 = vmatpush.bf16.msra.mxu0 0
      %672 = vmatpush.bf16.msra.mxu0 0
      %673 = vmatpush.bf16.msra.mxu0 0
      %674 = vmatpush.bf16.msra.mxu0 %v613
      %675 = vmatmul.bf16.gmra.mxu0 %v586
      %v676 = vpop.f32.mrf.mxu0
      %v677 = vadd.f32 %v457, %v676
      %v678 = vpop.f32.mrf.mxu0
      %v679 = vadd.f32 %v459, %v678
      %680 = vmatmul.bf16.gmra.mxu0 %v589
      %v681 = vpop.f32.mrf.mxu0
      %v682 = vadd.f32 %v462, %v681
      %v683 = vpop.f32.mrf.mxu0
      %v684 = vadd.f32 %v464, %v683
      %685 = vmatmul.bf16.gmra.mxu0 %v592
      %v686 = vpop.f32.mrf.mxu0
      %v687 = vadd.f32 %v467, %v686
      %v688 = vpop.f32.mrf.mxu0
      %v689 = vadd.f32 %v469, %v688
      %690 = vmatmul.bf16.gmra.mxu0 %v595
      %v691 = vpop.f32.mrf.mxu0
      %v692 = vadd.f32 %v472, %v691
      %v693 = vpop.f32.mrf.mxu0
      %v694 = vadd.f32 %v474, %v693
      %695 = vmatmul.bf16.gmra.mxu0 %v598
      %v696 = vpop.f32.mrf.mxu0
      %v697 = vadd.f32 %v477, %v696
      %v698 = vpop.f32.mrf.mxu0
      %v699 = vadd.f32 %v479, %v698
      %700 = vmatmul.bf16.gmra.mxu0 %v601
      %v701 = vpop.f32.mrf.mxu0
      %v702 = vadd.f32 %v482, %v701
      %v703 = vpop.f32.mrf.mxu0
      %v704 = vadd.f32 %v484, %v703
      %705 = vmatmul.bf16.gmra.mxu0 %v604
      %v706 = vpop.f32.mrf.mxu0
      %v707 = vadd.f32 %v487, %v706
      %v708 = vpop.f32.mrf.mxu0
      %v709 = vadd.f32 %v489, %v708
      %710 = vmatmul.bf16.gmra.mxu0 %v607
      %v711 = vpop.f32.mrf.mxu0
      %v712 = vadd.f32 %v492, %v711
      %v713 = vpop.f32.mrf.mxu0
      %v714 = vadd.f32 %v494, %v713
      %715 = vdwg.mxu0
      %716 = vmatpush.bf16.msra.mxu0 0
      %717 = vmatpush.bf16.msra.mxu0 0
      %718 = vmatpush.bf16.msra.mxu0 0
      %719 = vmatpush.bf16.msra.mxu0 0
      %720 = vmatpush.bf16.msra.mxu0 0
      %721 = vmatpush.bf16.msra.mxu0 0
      %722 = vmatpush.bf16.msra.mxu0 0
      %723 = vmatpush.bf16.msra.mxu0 %v616
      %724 = vmatmul.bf16.gmra.mxu0 %v586
      %v725 = vpop.f32.mrf.mxu0
      %v726 = vadd.f32 %v506, %v725
      %v727 = vpop.f32.mrf.mxu0
      %v728 = vadd.f32 %v508, %v727
      %729 = vmatmul.bf16.gmra.mxu0 %v589
      %v730 = vpop.f32.mrf.mxu0
      %v731 = vadd.f32 %v511, %v730
      %v732 = vpop.f32.mrf.mxu0
      %v733 = vadd.f32 %v513, %v732
      %734 = vmatmul.bf16.gmra.mxu0 %v592
      %v735 = vpop.f32.mrf.mxu0
      %v736 = vadd.f32 %v516, %v735
      %v737 = vpop.f32.mrf.mxu0
      %v738 = vadd.f32 %v518, %v737
      %739 = vmatmul.bf16.gmra.mxu0 %v595
      %v740 = vpop.f32.mrf.mxu0
      %v741 = vadd.f32 %v521, %v740
      %v742 = vpop.f32.mrf.mxu0
      %v743 = vadd.f32 %v523, %v742
      %744 = vmatmul.bf16.gmra.mxu0 %v598
      %v745 = vpop.f32.mrf.mxu0
      %v746 = vadd.f32 %v526, %v745
      %v747 = vpop.f32.mrf.mxu0
      %v748 = vadd.f32 %v528, %v747
      %749 = vmatmul.bf16.gmra.mxu0 %v601
      %v750 = vpop.f32.mrf.mxu0
      %v751 = vadd.f32 %v531, %v750
      %v752 = vpop.f32.mrf.mxu0
      %v753 = vadd.f32 %v533, %v752
      %754 = vmatmul.bf16.gmra.mxu0 %v604
      %v755 = vpop.f32.mrf.mxu0
      %v756 = vadd.f32 %v536, %v755
      %v757 = vpop.f32.mrf.mxu0
      %v758 = vadd.f32 %v538, %v757
      %759 = vmatmul.bf16.gmra.mxu0 %v607
      %v760 = vpop.f32.mrf.mxu0
      %v761 = vadd.f32 %v541, %v760
      %v762 = vpop.f32.mrf.mxu0
      %v763 = vadd.f32 %v543, %v762
      %764 = vdwg.mxu0
      %s765 = scalar_lea.vmem %s245, 128
      %v766 = vld [vmem:[%s765] sm:$0xf]
      %v767 = vld [vmem:[%s765 + $0x4] sm:$0xf]
      %v768 = vld [vmem:[%s765 + $0x8] sm:$0xf]
      %v769 = vld [vmem:[%s765 + $0xc] sm:$0xf]
      %v770 = vld [vmem:[%s765 + $0x10] sm:$0xf]
      %v771 = vld [vmem:[%s765 + $0x14] sm:$0xf]
      %v772 = vld [vmem:[%s765 + $0x18] sm:$0xf]
      %v773 = vld [vmem:[%s765 + $0x1c] sm:$0xf]
      %v774 = vld [vmem:[%s765 + $0x20] sm:$0xf]
      %v775 = vld [vmem:[%s765 + $0x24] sm:$0xf]
      %v776 = vld [vmem:[%s765 + $0x28] sm:$0xf]
      %v777 = vld [vmem:[%s765 + $0x2c] sm:$0xf]
      %v778 = vld [vmem:[%s765 + $0x30] sm:$0xf]
      %v779 = vld [vmem:[%s765 + $0x34] sm:$0xf]
      %v780 = vld [vmem:[%s765 + $0x38] sm:$0xf]
      %v781 = vld [vmem:[%s765 + $0x3c] sm:$0xf]
      %v798 = vunpack.c.l.b16 %v766
      %v799 = vunpack.c.l.b16 %v767
      %v800 = vunpack.c.l.b16 %v768
      %v801 = vunpack.c.l.b16 %v769
      %v802 = vunpack.c.l.b16 %v770
      %v803 = vunpack.c.l.b16 %v771
      %v804 = vunpack.c.l.b16 %v772
      %v805 = vunpack.c.l.b16 %v773
      %v806 = vunpack.c.l.b16 %v774
      %v807 = vunpack.c.l.b16 %v775
      %v808 = vunpack.c.l.b16 %v776
      %v809 = vunpack.c.l.b16 %v777
      %v810 = vunpack.c.l.b16 %v778
      %v811 = vunpack.c.l.b16 %v779
      %v812 = vunpack.c.l.b16 %v780
      %v813 = vunpack.c.l.b16 %v781
      %v814 = vpack.c.b16 %v799, %v798
      %v815 = vpack.c.b16 %v801, %v800
      %v816 = vpack.c.b16 %v803, %v802
      %v817 = vpack.c.b16 %v805, %v804
      %v818 = vpack.c.b16 %v807, %v806
      %v819 = vpack.c.b16 %v809, %v808
      %v820 = vpack.c.b16 %v811, %v810
      %v821 = vpack.c.b16 %v813, %v812
      %822 = vrot.lane.b32.xlu0 %v347, 126
      %v823 = vpop.permute.xlu0 %822
      %824 = vrot.lane.b32.xlu0 %v348, 126
      %v825 = vpop.permute.xlu0 %824
      %826 = vrot.lane.b32.xlu0 %v349, 126
      %v827 = vpop.permute.xlu0 %826
      %828 = vrot.lane.b32.xlu0 %v350, 126
      %v829 = vpop.permute.xlu0 %828
      %vm830 = vcmask 1031168
      %v831 = vsel %vm830, %v823, %v825
      %v832 = vsel %vm830, %v825, %v827
      %v833 = vsel %vm830, %v827, %v829
      %v835 = vsel %vm363, %v814, 0
      %v838 = vsel %vm363, %v815, 0
      %v841 = vsel %vm363, %v816, 0
      %v844 = vsel %vm363, %v817, 0
      %v847 = vsel %vm363, %v818, 0
      %v850 = vsel %vm363, %v819, 0
      %v853 = vsel %vm363, %v820, 0
      %v856 = vsel %vm363, %v821, 0
      %v859 = vsel %vm388, %v831, 0
      %v862 = vsel %vm388, %v832, 0
      %v865 = vsel %vm388, %v833, 0
      %867 = vmatpush.bf16.msra.mxu0 0
      %868 = vmatpush.bf16.msra.mxu0 0
      %869 = vmatpush.bf16.msra.mxu0 0
      %870 = vmatpush.bf16.msra.mxu0 0
      %871 = vmatpush.bf16.msra.mxu0 0
      %872 = vmatpush.bf16.msra.mxu0 0
      %873 = vmatpush.bf16.msra.mxu0 0
      %874 = vmatpush.bf16.msra.mxu0 %v859
      %875 = vmatmul.bf16.gmra.mxu0 %v835
      %v876 = vpop.f32.mrf.mxu0
      %v877 = vadd.f32 0.0, %v876
      %v878 = vpop.f32.mrf.mxu0
      %v879 = vadd.f32 0.0, %v878
      %880 = vmatmul.bf16.gmra.mxu0 %v838
      %v881 = vpop.f32.mrf.mxu0
      %v882 = vadd.f32 0.0, %v881
      %v883 = vpop.f32.mrf.mxu0
      %v884 = vadd.f32 0.0, %v883
      %885 = vmatmul.bf16.gmra.mxu0 %v841
      %v886 = vpop.f32.mrf.mxu0
      %v887 = vadd.f32 0.0, %v886
      %v888 = vpop.f32.mrf.mxu0
      %v889 = vadd.f32 0.0, %v888
      %890 = vmatmul.bf16.gmra.mxu0 %v844
      %v891 = vpop.f32.mrf.mxu0
      %v892 = vadd.f32 0.0, %v891
      %v893 = vpop.f32.mrf.mxu0
      %v894 = vadd.f32 0.0, %v893
      %895 = vmatmul.bf16.gmra.mxu0 %v847
      %v896 = vpop.f32.mrf.mxu0
      %v897 = vadd.f32 0.0, %v896
      %v898 = vpop.f32.mrf.mxu0
      %v899 = vadd.f32 0.0, %v898
      %900 = vmatmul.bf16.gmra.mxu0 %v850
      %v901 = vpop.f32.mrf.mxu0
      %v902 = vadd.f32 0.0, %v901
      %v903 = vpop.f32.mrf.mxu0
      %v904 = vadd.f32 0.0, %v903
      %905 = vmatmul.bf16.gmra.mxu0 %v853
      %v906 = vpop.f32.mrf.mxu0
      %v907 = vadd.f32 0.0, %v906
      %v908 = vpop.f32.mrf.mxu0
      %v909 = vadd.f32 0.0, %v908
      %910 = vmatmul.bf16.gmra.mxu0 %v856
      %v911 = vpop.f32.mrf.mxu0
      %v912 = vadd.f32 0.0, %v911
      %v913 = vpop.f32.mrf.mxu0
      %v914 = vadd.f32 0.0, %v913
      %915 = vdwg.mxu0
      %916 = vmatpush.bf16.msra.mxu0 0
      %917 = vmatpush.bf16.msra.mxu0 0
      %918 = vmatpush.bf16.msra.mxu0 0
      %919 = vmatpush.bf16.msra.mxu0 0
      %920 = vmatpush.bf16.msra.mxu0 0
      %921 = vmatpush.bf16.msra.mxu0 0
      %922 = vmatpush.bf16.msra.mxu0 0
      %923 = vmatpush.bf16.msra.mxu0 %v862
      %924 = vmatmul.bf16.gmra.mxu0 %v835
      %v925 = vpop.f32.mrf.mxu0
      %v926 = vadd.f32 0.0, %v925
      %v927 = vpop.f32.mrf.mxu0
      %v928 = vadd.f32 0.0, %v927
      %929 = vmatmul.bf16.gmra.mxu0 %v838
      %v930 = vpop.f32.mrf.mxu0
      %v931 = vadd.f32 0.0, %v930
      %v932 = vpop.f32.mrf.mxu0
      %v933 = vadd.f32 0.0, %v932
      %934 = vmatmul.bf16.gmra.mxu0 %v841
      %v935 = vpop.f32.mrf.mxu0
      %v936 = vadd.f32 0.0, %v935
      %v937 = vpop.f32.mrf.mxu0
      %v938 = vadd.f32 0.0, %v937
      %939 = vmatmul.bf16.gmra.mxu0 %v844
      %v940 = vpop.f32.mrf.mxu0
      %v941 = vadd.f32 0.0, %v940
      %v942 = vpop.f32.mrf.mxu0
      %v943 = vadd.f32 0.0, %v942
      %944 = vmatmul.bf16.gmra.mxu0 %v847
      %v945 = vpop.f32.mrf.mxu0
      %v946 = vadd.f32 0.0, %v945
      %v947 = vpop.f32.mrf.mxu0
      %v948 = vadd.f32 0.0, %v947
      %949 = vmatmul.bf16.gmra.mxu0 %v850
      %v950 = vpop.f32.mrf.mxu0
      %v951 = vadd.f32 0.0, %v950
      %v952 = vpop.f32.mrf.mxu0
      %v953 = vadd.f32 0.0, %v952
      %954 = vmatmul.bf16.gmra.mxu0 %v853
      %v955 = vpop.f32.mrf.mxu0
      %v956 = vadd.f32 0.0, %v955
      %v957 = vpop.f32.mrf.mxu0
      %v958 = vadd.f32 0.0, %v957
      %959 = vmatmul.bf16.gmra.mxu0 %v856
      %v960 = vpop.f32.mrf.mxu0
      %v961 = vadd.f32 0.0, %v960
      %v962 = vpop.f32.mrf.mxu0
      %v963 = vadd.f32 0.0, %v962
      %964 = vdwg.mxu0
      %965 = vmatpush.bf16.msra.mxu0 0
      %966 = vmatpush.bf16.msra.mxu0 0
      %967 = vmatpush.bf16.msra.mxu0 0
      %968 = vmatpush.bf16.msra.mxu0 0
      %969 = vmatpush.bf16.msra.mxu0 0
      %970 = vmatpush.bf16.msra.mxu0 0
      %971 = vmatpush.bf16.msra.mxu0 0
      %972 = vmatpush.bf16.msra.mxu0 %v865
      %973 = vmatmul.bf16.gmra.mxu0 %v835
      %v974 = vpop.f32.mrf.mxu0
      %v975 = vadd.f32 0.0, %v974
      %v976 = vpop.f32.mrf.mxu0
      %v977 = vadd.f32 0.0, %v976
      %978 = vmatmul.bf16.gmra.mxu0 %v838
      %v979 = vpop.f32.mrf.mxu0
      %v980 = vadd.f32 0.0, %v979
      %v981 = vpop.f32.mrf.mxu0
      %v982 = vadd.f32 0.0, %v981
      %983 = vmatmul.bf16.gmra.mxu0 %v841
      %v984 = vpop.f32.mrf.mxu0
      %v985 = vadd.f32 0.0, %v984
      %v986 = vpop.f32.mrf.mxu0
      %v987 = vadd.f32 0.0, %v986
      %988 = vmatmul.bf16.gmra.mxu0 %v844
      %v989 = vpop.f32.mrf.mxu0
      %v990 = vadd.f32 0.0, %v989
      %v991 = vpop.f32.mrf.mxu0
      %v992 = vadd.f32 0.0, %v991
      %993 = vmatmul.bf16.gmra.mxu0 %v847
      %v994 = vpop.f32.mrf.mxu0
      %v995 = vadd.f32 0.0, %v994
      %v996 = vpop.f32.mrf.mxu0
      %v997 = vadd.f32 0.0, %v996
      %998 = vmatmul.bf16.gmra.mxu0 %v850
      %v999 = vpop.f32.mrf.mxu0
      %v1000 = vadd.f32 0.0, %v999
      %v1001 = vpop.f32.mrf.mxu0
      %v1002 = vadd.f32 0.0, %v1001
      %1003 = vmatmul.bf16.gmra.mxu0 %v853
      %v1004 = vpop.f32.mrf.mxu0
      %v1005 = vadd.f32 0.0, %v1004
      %v1006 = vpop.f32.mrf.mxu0
      %v1007 = vadd.f32 0.0, %v1006
      %1008 = vmatmul.bf16.gmra.mxu0 %v856
      %v1009 = vpop.f32.mrf.mxu0
      %v1010 = vadd.f32 0.0, %v1009
      %v1011 = vpop.f32.mrf.mxu0
      %v1012 = vadd.f32 0.0, %v1011
      %1013 = vdwg.mxu0
      %v1014 = vadd.f32 %v628, %v877
      %v1015 = vadd.f32 %v677, %v926
      %v1016 = vadd.f32 %v726, %v975
      %v1017 = vadd.f32 %v630, %v879
      %v1018 = vadd.f32 %v679, %v928
      %v1019 = vadd.f32 %v728, %v977
      %v1020 = vadd.f32 %v633, %v882
      %v1021 = vadd.f32 %v682, %v931
      %v1022 = vadd.f32 %v731, %v980
      %v1023 = vadd.f32 %v635, %v884
      %v1024 = vadd.f32 %v684, %v933
      %v1025 = vadd.f32 %v733, %v982
      %v1026 = vadd.f32 %v638, %v887
      %v1027 = vadd.f32 %v687, %v936
      %v1028 = vadd.f32 %v736, %v985
      %v1029 = vadd.f32 %v640, %v889
      %v1030 = vadd.f32 %v689, %v938
      %v1031 = vadd.f32 %v738, %v987
      %v1032 = vadd.f32 %v643, %v892
      %v1033 = vadd.f32 %v692, %v941
      %v1034 = vadd.f32 %v741, %v990
      %v1035 = vadd.f32 %v645, %v894
      %v1036 = vadd.f32 %v694, %v943
      %v1037 = vadd.f32 %v743, %v992
      %v1038 = vadd.f32 %v648, %v897
      %v1039 = vadd.f32 %v697, %v946
      %v1040 = vadd.f32 %v746, %v995
      %v1041 = vadd.f32 %v650, %v899
      %v1042 = vadd.f32 %v699, %v948
      %v1043 = vadd.f32 %v748, %v997
      %v1044 = vadd.f32 %v653, %v902
      %v1045 = vadd.f32 %v702, %v951
      %v1046 = vadd.f32 %v751, %v1000
      %v1047 = vadd.f32 %v655, %v904
      %v1048 = vadd.f32 %v704, %v953
      %v1049 = vadd.f32 %v753, %v1002
      %v1050 = vadd.f32 %v658, %v907
      %v1051 = vadd.f32 %v707, %v956
      %v1052 = vadd.f32 %v756, %v1005
      %v1053 = vadd.f32 %v660, %v909
      %v1054 = vadd.f32 %v709, %v958
      %v1055 = vadd.f32 %v758, %v1007
      %v1056 = vadd.f32 %v663, %v912
      %v1057 = vadd.f32 %v712, %v961
      %v1058 = vadd.f32 %v761, %v1010
      %v1059 = vadd.f32 %v665, %v914
      %v1060 = vadd.f32 %v714, %v963
      %v1061 = vadd.f32 %v763, %v1012
      %s1062 = scalar_lea.vmem %s245, 192
      %v1063 = vld [vmem:[%s1062] sm:$0xf]
      %v1064 = vld [vmem:[%s1062 + $0x4] sm:$0xf]
      %v1065 = vld [vmem:[%s1062 + $0x8] sm:$0xf]
      %v1066 = vld [vmem:[%s1062 + $0xc] sm:$0xf]
      %v1067 = vld [vmem:[%s1062 + $0x10] sm:$0xf]
      %v1068 = vld [vmem:[%s1062 + $0x14] sm:$0xf]
      %v1069 = vld [vmem:[%s1062 + $0x18] sm:$0xf]
      %v1070 = vld [vmem:[%s1062 + $0x1c] sm:$0xf]
      %v1071 = vld [vmem:[%s1062 + $0x20] sm:$0xf]
      %v1072 = vld [vmem:[%s1062 + $0x24] sm:$0xf]
      %v1073 = vld [vmem:[%s1062 + $0x28] sm:$0xf]
      %v1074 = vld [vmem:[%s1062 + $0x2c] sm:$0xf]
      %v1075 = vld [vmem:[%s1062 + $0x30] sm:$0xf]
      %v1076 = vld [vmem:[%s1062 + $0x34] sm:$0xf]
      %v1077 = vld [vmem:[%s1062 + $0x38] sm:$0xf]
      %v1078 = vld [vmem:[%s1062 + $0x3c] sm:$0xf]
      %v1095 = vunpack.c.l.b16 %v1063
      %v1096 = vunpack.c.l.b16 %v1064
      %v1097 = vunpack.c.l.b16 %v1065
      %v1098 = vunpack.c.l.b16 %v1066
      %v1099 = vunpack.c.l.b16 %v1067
      %v1100 = vunpack.c.l.b16 %v1068
      %v1101 = vunpack.c.l.b16 %v1069
      %v1102 = vunpack.c.l.b16 %v1070
      %v1103 = vunpack.c.l.b16 %v1071
      %v1104 = vunpack.c.l.b16 %v1072
      %v1105 = vunpack.c.l.b16 %v1073
      %v1106 = vunpack.c.l.b16 %v1074
      %v1107 = vunpack.c.l.b16 %v1075
      %v1108 = vunpack.c.l.b16 %v1076
      %v1109 = vunpack.c.l.b16 %v1077
      %v1110 = vunpack.c.l.b16 %v1078
      %v1111 = vpack.c.b16 %v1096, %v1095
      %v1112 = vpack.c.b16 %v1098, %v1097
      %v1113 = vpack.c.b16 %v1100, %v1099
      %v1114 = vpack.c.b16 %v1102, %v1101
      %v1115 = vpack.c.b16 %v1104, %v1103
      %v1116 = vpack.c.b16 %v1106, %v1105
      %v1117 = vpack.c.b16 %v1108, %v1107
      %v1118 = vpack.c.b16 %v1110, %v1109
      %1119 = vrot.lane.b32.xlu0 %v347, 110
      %v1120 = vpop.permute.xlu0 %1119
      %1121 = vrot.lane.b32.xlu0 %v348, 110
      %v1122 = vpop.permute.xlu0 %1121
      %1123 = vrot.lane.b32.xlu0 %v349, 110
      %v1124 = vpop.permute.xlu0 %1123
      %1125 = vrot.lane.b32.xlu0 %v350, 110
      %v1126 = vpop.permute.xlu0 %1125
      %vm1127 = vcmask 900096
      %v1128 = vsel %vm1127, %v1120, %v1122
      %v1129 = vsel %vm1127, %v1122, %v1124
      %v1130 = vsel %vm1127, %v1124, %v1126
      %v1132 = vsel %vm363, %v1111, 0
      %v1135 = vsel %vm363, %v1112, 0
      %v1138 = vsel %vm363, %v1113, 0
      %v1141 = vsel %vm363, %v1114, 0
      %v1144 = vsel %vm363, %v1115, 0
      %v1147 = vsel %vm363, %v1116, 0
      %v1150 = vsel %vm363, %v1117, 0
      %v1153 = vsel %vm363, %v1118, 0
      %v1156 = vsel %vm388, %v1128, 0
      %v1159 = vsel %vm388, %v1129, 0
      %v1162 = vsel %vm388, %v1130, 0
      %1164 = vmatpush.bf16.msra.mxu0 0
      %1165 = vmatpush.bf16.msra.mxu0 0
      %1166 = vmatpush.bf16.msra.mxu0 0
      %1167 = vmatpush.bf16.msra.mxu0 0
      %1168 = vmatpush.bf16.msra.mxu0 0
      %1169 = vmatpush.bf16.msra.mxu0 0
      %1170 = vmatpush.bf16.msra.mxu0 0
      %1171 = vmatpush.bf16.msra.mxu0 %v1156
      %1172 = vmatmul.bf16.gmra.mxu0 %v1132
      %v1173 = vpop.f32.mrf.mxu0
      %v1174 = vadd.f32 0.0, %v1173
      %v1175 = vpop.f32.mrf.mxu0
      %v1176 = vadd.f32 0.0, %v1175
      %1177 = vmatmul.bf16.gmra.mxu0 %v1135
      %v1178 = vpop.f32.mrf.mxu0
      %v1179 = vadd.f32 0.0, %v1178
      %v1180 = vpop.f32.mrf.mxu0
      %v1181 = vadd.f32 0.0, %v1180
      %1182 = vmatmul.bf16.gmra.mxu0 %v1138
      %v1183 = vpop.f32.mrf.mxu0
      %v1184 = vadd.f32 0.0, %v1183
      %v1185 = vpop.f32.mrf.mxu0
      %v1186 = vadd.f32 0.0, %v1185
      %1187 = vmatmul.bf16.gmra.mxu0 %v1141
      %v1188 = vpop.f32.mrf.mxu0
      %v1189 = vadd.f32 0.0, %v1188
      %v1190 = vpop.f32.mrf.mxu0
      %v1191 = vadd.f32 0.0, %v1190
      %1192 = vmatmul.bf16.gmra.mxu0 %v1144
      %v1193 = vpop.f32.mrf.mxu0
      %v1194 = vadd.f32 0.0, %v1193
      %v1195 = vpop.f32.mrf.mxu0
      %v1196 = vadd.f32 0.0, %v1195
      %1197 = vmatmul.bf16.gmra.mxu0 %v1147
      %v1198 = vpop.f32.mrf.mxu0
      %v1199 = vadd.f32 0.0, %v1198
      %v1200 = vpop.f32.mrf.mxu0
      %v1201 = vadd.f32 0.0, %v1200
      %1202 = vmatmul.bf16.gmra.mxu0 %v1150
      %v1203 = vpop.f32.mrf.mxu0
      %v1204 = vadd.f32 0.0, %v1203
      %v1205 = vpop.f32.mrf.mxu0
      %v1206 = vadd.f32 0.0, %v1205
      %1207 = vmatmul.bf16.gmra.mxu0 %v1153
      %v1208 = vpop.f32.mrf.mxu0
      %v1209 = vadd.f32 0.0, %v1208
      %v1210 = vpop.f32.mrf.mxu0
      %v1211 = vadd.f32 0.0, %v1210
      %1212 = vdwg.mxu0
      %1213 = vmatpush.bf16.msra.mxu0 0
      %1214 = vmatpush.bf16.msra.mxu0 0
      %1215 = vmatpush.bf16.msra.mxu0 0
      %1216 = vmatpush.bf16.msra.mxu0 0
      %1217 = vmatpush.bf16.msra.mxu0 0
      %1218 = vmatpush.bf16.msra.mxu0 0
      %1219 = vmatpush.bf16.msra.mxu0 0
      %1220 = vmatpush.bf16.msra.mxu0 %v1159
      %1221 = vmatmul.bf16.gmra.mxu0 %v1132
      %v1222 = vpop.f32.mrf.mxu0
      %v1223 = vadd.f32 0.0, %v1222
      %v1224 = vpop.f32.mrf.mxu0
      %v1225 = vadd.f32 0.0, %v1224
      %1226 = vmatmul.bf16.gmra.mxu0 %v1135
      %v1227 = vpop.f32.mrf.mxu0
      %v1228 = vadd.f32 0.0, %v1227
      %v1229 = vpop.f32.mrf.mxu0
      %v1230 = vadd.f32 0.0, %v1229
      %1231 = vmatmul.bf16.gmra.mxu0 %v1138
      %v1232 = vpop.f32.mrf.mxu0
      %v1233 = vadd.f32 0.0, %v1232
      %v1234 = vpop.f32.mrf.mxu0
      %v1235 = vadd.f32 0.0, %v1234
      %1236 = vmatmul.bf16.gmra.mxu0 %v1141
      %v1237 = vpop.f32.mrf.mxu0
      %v1238 = vadd.f32 0.0, %v1237
      %v1239 = vpop.f32.mrf.mxu0
      %v1240 = vadd.f32 0.0, %v1239
      %1241 = vmatmul.bf16.gmra.mxu0 %v1144
      %v1242 = vpop.f32.mrf.mxu0
      %v1243 = vadd.f32 0.0, %v1242
      %v1244 = vpop.f32.mrf.mxu0
      %v1245 = vadd.f32 0.0, %v1244
      %1246 = vmatmul.bf16.gmra.mxu0 %v1147
      %v1247 = vpop.f32.mrf.mxu0
      %v1248 = vadd.f32 0.0, %v1247
      %v1249 = vpop.f32.mrf.mxu0
      %v1250 = vadd.f32 0.0, %v1249
      %1251 = vmatmul.bf16.gmra.mxu0 %v1150
      %v1252 = vpop.f32.mrf.mxu0
      %v1253 = vadd.f32 0.0, %v1252
      %v1254 = vpop.f32.mrf.mxu0
      %v1255 = vadd.f32 0.0, %v1254
      %1256 = vmatmul.bf16.gmra.mxu0 %v1153
      %v1257 = vpop.f32.mrf.mxu0
      %v1258 = vadd.f32 0.0, %v1257
      %v1259 = vpop.f32.mrf.mxu0
      %v1260 = vadd.f32 0.0, %v1259
      %1261 = vdwg.mxu0
      %1262 = vmatpush.bf16.msra.mxu0 0
      %1263 = vmatpush.bf16.msra.mxu0 0
      %1264 = vmatpush.bf16.msra.mxu0 0
      %1265 = vmatpush.bf16.msra.mxu0 0
      %1266 = vmatpush.bf16.msra.mxu0 0
      %1267 = vmatpush.bf16.msra.mxu0 0
      %1268 = vmatpush.bf16.msra.mxu0 0
      %1269 = vmatpush.bf16.msra.mxu0 %v1162
      %1270 = vmatmul.bf16.gmra.mxu0 %v1132
      %v1271 = vpop.f32.mrf.mxu0
      %v1272 = vadd.f32 0.0, %v1271
      %v1273 = vpop.f32.mrf.mxu0
      %v1274 = vadd.f32 0.0, %v1273
      %1275 = vmatmul.bf16.gmra.mxu0 %v1135
      %v1276 = vpop.f32.mrf.mxu0
      %v1277 = vadd.f32 0.0, %v1276
      %v1278 = vpop.f32.mrf.mxu0
      %v1279 = vadd.f32 0.0, %v1278
      %1280 = vmatmul.bf16.gmra.mxu0 %v1138
      %v1281 = vpop.f32.mrf.mxu0
      %v1282 = vadd.f32 0.0, %v1281
      %v1283 = vpop.f32.mrf.mxu0
      %v1284 = vadd.f32 0.0, %v1283
      %1285 = vmatmul.bf16.gmra.mxu0 %v1141
      %v1286 = vpop.f32.mrf.mxu0
      %v1287 = vadd.f32 0.0, %v1286
      %v1288 = vpop.f32.mrf.mxu0
      %v1289 = vadd.f32 0.0, %v1288
      %1290 = vmatmul.bf16.gmra.mxu0 %v1144
      %v1291 = vpop.f32.mrf.mxu0
      %v1292 = vadd.f32 0.0, %v1291
      %v1293 = vpop.f32.mrf.mxu0
      %v1294 = vadd.f32 0.0, %v1293
      %1295 = vmatmul.bf16.gmra.mxu0 %v1147
      %v1296 = vpop.f32.mrf.mxu0
      %v1297 = vadd.f32 0.0, %v1296
      %v1298 = vpop.f32.mrf.mxu0
      %v1299 = vadd.f32 0.0, %v1298
      %1300 = vmatmul.bf16.gmra.mxu0 %v1150
      %v1301 = vpop.f32.mrf.mxu0
      %v1302 = vadd.f32 0.0, %v1301
      %v1303 = vpop.f32.mrf.mxu0
      %v1304 = vadd.f32 0.0, %v1303
      %1305 = vmatmul.bf16.gmra.mxu0 %v1153
      %v1306 = vpop.f32.mrf.mxu0
      %v1307 = vadd.f32 0.0, %v1306
      %v1308 = vpop.f32.mrf.mxu0
      %v1309 = vadd.f32 0.0, %v1308
      %1310 = vdwg.mxu0
      %v1311 = vadd.f32 %v1014, %v1174
      %v1312 = vadd.f32 %v1015, %v1223
      %v1313 = vadd.f32 %v1016, %v1272
      %v1314 = vadd.f32 %v1017, %v1176
      %v1315 = vadd.f32 %v1018, %v1225
      %v1316 = vadd.f32 %v1019, %v1274
      %v1317 = vadd.f32 %v1020, %v1179
      %v1318 = vadd.f32 %v1021, %v1228
      %v1319 = vadd.f32 %v1022, %v1277
      %v1320 = vadd.f32 %v1023, %v1181
      %v1321 = vadd.f32 %v1024, %v1230
      %v1322 = vadd.f32 %v1025, %v1279
      %v1323 = vadd.f32 %v1026, %v1184
      %v1324 = vadd.f32 %v1027, %v1233
      %v1325 = vadd.f32 %v1028, %v1282
      %v1326 = vadd.f32 %v1029, %v1186
      %v1327 = vadd.f32 %v1030, %v1235
      %v1328 = vadd.f32 %v1031, %v1284
      %v1329 = vadd.f32 %v1032, %v1189
      %v1330 = vadd.f32 %v1033, %v1238
      %v1331 = vadd.f32 %v1034, %v1287
      %v1332 = vadd.f32 %v1035, %v1191
      %v1333 = vadd.f32 %v1036, %v1240
      %v1334 = vadd.f32 %v1037, %v1289
      %v1335 = vadd.f32 %v1038, %v1194
      %v1336 = vadd.f32 %v1039, %v1243
      %v1337 = vadd.f32 %v1040, %v1292
      %v1338 = vadd.f32 %v1041, %v1196
      %v1339 = vadd.f32 %v1042, %v1245
      %v1340 = vadd.f32 %v1043, %v1294
      %v1341 = vadd.f32 %v1044, %v1199
      %v1342 = vadd.f32 %v1045, %v1248
      %v1343 = vadd.f32 %v1046, %v1297
      %v1344 = vadd.f32 %v1047, %v1201
      %v1345 = vadd.f32 %v1048, %v1250
      %v1346 = vadd.f32 %v1049, %v1299
      %v1347 = vadd.f32 %v1050, %v1204
      %v1348 = vadd.f32 %v1051, %v1253
      %v1349 = vadd.f32 %v1052, %v1302
      %v1350 = vadd.f32 %v1053, %v1206
      %v1351 = vadd.f32 %v1054, %v1255
      %v1352 = vadd.f32 %v1055, %v1304
      %v1353 = vadd.f32 %v1056, %v1209
      %v1354 = vadd.f32 %v1057, %v1258
      %v1355 = vadd.f32 %v1058, %v1307
      %v1356 = vadd.f32 %v1059, %v1211
      %v1357 = vadd.f32 %v1060, %v1260
      %v1358 = vadd.f32 %v1061, %v1309
      %s1359 = scalar_lea.vmem %s245, 256
      %v1360 = vld [vmem:[%s1359] sm:$0xf]
      %v1361 = vld [vmem:[%s1359 + $0x4] sm:$0xf]
      %v1362 = vld [vmem:[%s1359 + $0x8] sm:$0xf]
      %v1363 = vld [vmem:[%s1359 + $0xc] sm:$0xf]
      %v1364 = vld [vmem:[%s1359 + $0x10] sm:$0xf]
      %v1365 = vld [vmem:[%s1359 + $0x14] sm:$0xf]
      %v1366 = vld [vmem:[%s1359 + $0x18] sm:$0xf]
      %v1367 = vld [vmem:[%s1359 + $0x1c] sm:$0xf]
      %v1368 = vld [vmem:[%s1359 + $0x20] sm:$0xf]
      %v1369 = vld [vmem:[%s1359 + $0x24] sm:$0xf]
      %v1370 = vld [vmem:[%s1359 + $0x28] sm:$0xf]
      %v1371 = vld [vmem:[%s1359 + $0x2c] sm:$0xf]
      %v1372 = vld [vmem:[%s1359 + $0x30] sm:$0xf]
      %v1373 = vld [vmem:[%s1359 + $0x34] sm:$0xf]
      %v1374 = vld [vmem:[%s1359 + $0x38] sm:$0xf]
      %v1375 = vld [vmem:[%s1359 + $0x3c] sm:$0xf]
      %v1392 = vunpack.c.l.b16 %v1360
      %v1393 = vunpack.c.l.b16 %v1361
      %v1394 = vunpack.c.l.b16 %v1362
      %v1395 = vunpack.c.l.b16 %v1363
      %v1396 = vunpack.c.l.b16 %v1364
      %v1397 = vunpack.c.l.b16 %v1365
      %v1398 = vunpack.c.l.b16 %v1366
      %v1399 = vunpack.c.l.b16 %v1367
      %v1400 = vunpack.c.l.b16 %v1368
      %v1401 = vunpack.c.l.b16 %v1369
      %v1402 = vunpack.c.l.b16 %v1370
      %v1403 = vunpack.c.l.b16 %v1371
      %v1404 = vunpack.c.l.b16 %v1372
      %v1405 = vunpack.c.l.b16 %v1373
      %v1406 = vunpack.c.l.b16 %v1374
      %v1407 = vunpack.c.l.b16 %v1375
      %v1408 = vpack.c.b16 %v1393, %v1392
      %v1409 = vpack.c.b16 %v1395, %v1394
      %v1410 = vpack.c.b16 %v1397, %v1396
      %v1411 = vpack.c.b16 %v1399, %v1398
      %v1412 = vpack.c.b16 %v1401, %v1400
      %v1413 = vpack.c.b16 %v1403, %v1402
      %v1414 = vpack.c.b16 %v1405, %v1404
      %v1415 = vpack.c.b16 %v1407, %v1406
      %1416 = vrot.lane.b32.xlu0 %v347, 109
      %v1417 = vpop.permute.xlu0 %1416
      %1418 = vrot.lane.b32.xlu0 %v348, 109
      %v1419 = vpop.permute.xlu0 %1418
      %1420 = vrot.lane.b32.xlu0 %v349, 109
      %v1421 = vpop.permute.xlu0 %1420
      %1422 = vrot.lane.b32.xlu0 %v350, 109
      %v1423 = vpop.permute.xlu0 %1422
      %vm1424 = vcmask 891904
      %v1425 = vsel %vm1424, %v1417, %v1419
      %v1426 = vsel %vm1424, %v1419, %v1421
      %v1427 = vsel %vm1424, %v1421, %v1423
      %v1429 = vsel %vm363, %v1408, 0
      %v1432 = vsel %vm363, %v1409, 0
      %v1435 = vsel %vm363, %v1410, 0
      %v1438 = vsel %vm363, %v1411, 0
      %v1441 = vsel %vm363, %v1412, 0
      %v1444 = vsel %vm363, %v1413, 0
      %v1447 = vsel %vm363, %v1414, 0
      %v1450 = vsel %vm363, %v1415, 0
      %v1453 = vsel %vm388, %v1425, 0
      %v1456 = vsel %vm388, %v1426, 0
      %v1459 = vsel %vm388, %v1427, 0
      %1461 = vmatpush.bf16.msra.mxu0 0
      %1462 = vmatpush.bf16.msra.mxu0 0
      %1463 = vmatpush.bf16.msra.mxu0 0
      %1464 = vmatpush.bf16.msra.mxu0 0
      %1465 = vmatpush.bf16.msra.mxu0 0
      %1466 = vmatpush.bf16.msra.mxu0 0
      %1467 = vmatpush.bf16.msra.mxu0 0
      %1468 = vmatpush.bf16.msra.mxu0 %v1453
      %1469 = vmatmul.bf16.gmra.mxu0 %v1429
      %v1470 = vpop.f32.mrf.mxu0
      %v1471 = vadd.f32 0.0, %v1470
      %v1472 = vpop.f32.mrf.mxu0
      %v1473 = vadd.f32 0.0, %v1472
      %1474 = vmatmul.bf16.gmra.mxu0 %v1432
      %v1475 = vpop.f32.mrf.mxu0
      %v1476 = vadd.f32 0.0, %v1475
      %v1477 = vpop.f32.mrf.mxu0
      %v1478 = vadd.f32 0.0, %v1477
      %1479 = vmatmul.bf16.gmra.mxu0 %v1435
      %v1480 = vpop.f32.mrf.mxu0
      %v1481 = vadd.f32 0.0, %v1480
      %v1482 = vpop.f32.mrf.mxu0
      %v1483 = vadd.f32 0.0, %v1482
      %1484 = vmatmul.bf16.gmra.mxu0 %v1438
      %v1485 = vpop.f32.mrf.mxu0
      %v1486 = vadd.f32 0.0, %v1485
      %v1487 = vpop.f32.mrf.mxu0
      %v1488 = vadd.f32 0.0, %v1487
      %1489 = vmatmul.bf16.gmra.mxu0 %v1441
      %v1490 = vpop.f32.mrf.mxu0
      %v1491 = vadd.f32 0.0, %v1490
      %v1492 = vpop.f32.mrf.mxu0
      %v1493 = vadd.f32 0.0, %v1492
      %1494 = vmatmul.bf16.gmra.mxu0 %v1444
      %v1495 = vpop.f32.mrf.mxu0
      %v1496 = vadd.f32 0.0, %v1495
      %v1497 = vpop.f32.mrf.mxu0
      %v1498 = vadd.f32 0.0, %v1497
      %1499 = vmatmul.bf16.gmra.mxu0 %v1447
      %v1500 = vpop.f32.mrf.mxu0
      %v1501 = vadd.f32 0.0, %v1500
      %v1502 = vpop.f32.mrf.mxu0
      %v1503 = vadd.f32 0.0, %v1502
      %1504 = vmatmul.bf16.gmra.mxu0 %v1450
      %v1505 = vpop.f32.mrf.mxu0
      %v1506 = vadd.f32 0.0, %v1505
      %v1507 = vpop.f32.mrf.mxu0
      %v1508 = vadd.f32 0.0, %v1507
      %1509 = vdwg.mxu0
      %1510 = vmatpush.bf16.msra.mxu0 0
      %1511 = vmatpush.bf16.msra.mxu0 0
      %1512 = vmatpush.bf16.msra.mxu0 0
      %1513 = vmatpush.bf16.msra.mxu0 0
      %1514 = vmatpush.bf16.msra.mxu0 0
      %1515 = vmatpush.bf16.msra.mxu0 0
      %1516 = vmatpush.bf16.msra.mxu0 0
      %1517 = vmatpush.bf16.msra.mxu0 %v1456
      %1518 = vmatmul.bf16.gmra.mxu0 %v1429
      %v1519 = vpop.f32.mrf.mxu0
      %v1520 = vadd.f32 0.0, %v1519
      %v1521 = vpop.f32.mrf.mxu0
      %v1522 = vadd.f32 0.0, %v1521
      %1523 = vmatmul.bf16.gmra.mxu0 %v1432
      %v1524 = vpop.f32.mrf.mxu0
      %v1525 = vadd.f32 0.0, %v1524
      %v1526 = vpop.f32.mrf.mxu0
      %v1527 = vadd.f32 0.0, %v1526
      %1528 = vmatmul.bf16.gmra.mxu0 %v1435
      %v1529 = vpop.f32.mrf.mxu0
      %v1530 = vadd.f32 0.0, %v1529
      %v1531 = vpop.f32.mrf.mxu0
      %v1532 = vadd.f32 0.0, %v1531
      %1533 = vmatmul.bf16.gmra.mxu0 %v1438
      %v1534 = vpop.f32.mrf.mxu0
      %v1535 = vadd.f32 0.0, %v1534
      %v1536 = vpop.f32.mrf.mxu0
      %v1537 = vadd.f32 0.0, %v1536
      %1538 = vmatmul.bf16.gmra.mxu0 %v1441
      %v1539 = vpop.f32.mrf.mxu0
      %v1540 = vadd.f32 0.0, %v1539
      %v1541 = vpop.f32.mrf.mxu0
      %v1542 = vadd.f32 0.0, %v1541
      %1543 = vmatmul.bf16.gmra.mxu0 %v1444
      %v1544 = vpop.f32.mrf.mxu0
      %v1545 = vadd.f32 0.0, %v1544
      %v1546 = vpop.f32.mrf.mxu0
      %v1547 = vadd.f32 0.0, %v1546
      %1548 = vmatmul.bf16.gmra.mxu0 %v1447
      %v1549 = vpop.f32.mrf.mxu0
      %v1550 = vadd.f32 0.0, %v1549
      %v1551 = vpop.f32.mrf.mxu0
      %v1552 = vadd.f32 0.0, %v1551
      %1553 = vmatmul.bf16.gmra.mxu0 %v1450
      %v1554 = vpop.f32.mrf.mxu0
      %v1555 = vadd.f32 0.0, %v1554
      %v1556 = vpop.f32.mrf.mxu0
      %v1557 = vadd.f32 0.0, %v1556
      %1558 = vdwg.mxu0
      %1559 = vmatpush.bf16.msra.mxu0 0
      %1560 = vmatpush.bf16.msra.mxu0 0
      %1561 = vmatpush.bf16.msra.mxu0 0
      %1562 = vmatpush.bf16.msra.mxu0 0
      %1563 = vmatpush.bf16.msra.mxu0 0
      %1564 = vmatpush.bf16.msra.mxu0 0
      %1565 = vmatpush.bf16.msra.mxu0 0
      %1566 = vmatpush.bf16.msra.mxu0 %v1459
      %1567 = vmatmul.bf16.gmra.mxu0 %v1429
      %v1568 = vpop.f32.mrf.mxu0
      %v1569 = vadd.f32 0.0, %v1568
      %v1570 = vpop.f32.mrf.mxu0
      %v1571 = vadd.f32 0.0, %v1570
      %1572 = vmatmul.bf16.gmra.mxu0 %v1432
      %v1573 = vpop.f32.mrf.mxu0
      %v1574 = vadd.f32 0.0, %v1573
      %v1575 = vpop.f32.mrf.mxu0
      %v1576 = vadd.f32 0.0, %v1575
      %1577 = vmatmul.bf16.gmra.mxu0 %v1435
      %v1578 = vpop.f32.mrf.mxu0
      %v1579 = vadd.f32 0.0, %v1578
      %v1580 = vpop.f32.mrf.mxu0
      %v1581 = vadd.f32 0.0, %v1580
      %1582 = vmatmul.bf16.gmra.mxu0 %v1438
      %v1583 = vpop.f32.mrf.mxu0
      %v1584 = vadd.f32 0.0, %v1583
      %v1585 = vpop.f32.mrf.mxu0
      %v1586 = vadd.f32 0.0, %v1585
      %1587 = vmatmul.bf16.gmra.mxu0 %v1441
      %v1588 = vpop.f32.mrf.mxu0
      %v1589 = vadd.f32 0.0, %v1588
      %v1590 = vpop.f32.mrf.mxu0
      %v1591 = vadd.f32 0.0, %v1590
      %1592 = vmatmul.bf16.gmra.mxu0 %v1444
      %v1593 = vpop.f32.mrf.mxu0
      %v1594 = vadd.f32 0.0, %v1593
      %v1595 = vpop.f32.mrf.mxu0
      %v1596 = vadd.f32 0.0, %v1595
      %1597 = vmatmul.bf16.gmra.mxu0 %v1447
      %v1598 = vpop.f32.mrf.mxu0
      %v1599 = vadd.f32 0.0, %v1598
      %v1600 = vpop.f32.mrf.mxu0
      %v1601 = vadd.f32 0.0, %v1600
      %1602 = vmatmul.bf16.gmra.mxu0 %v1450
      %v1603 = vpop.f32.mrf.mxu0
      %v1604 = vadd.f32 0.0, %v1603
      %v1605 = vpop.f32.mrf.mxu0
      %v1606 = vadd.f32 0.0, %v1605
      %1607 = vdwg.mxu0
      %v1608 = vadd.f32 %v1311, %v1471
      %v1609 = vadd.f32 %v1312, %v1520
      %v1610 = vadd.f32 %v1313, %v1569
      %v1611 = vadd.f32 %v1314, %v1473
      %v1612 = vadd.f32 %v1315, %v1522
      %v1613 = vadd.f32 %v1316, %v1571
      %v1614 = vadd.f32 %v1317, %v1476
      %v1615 = vadd.f32 %v1318, %v1525
      %v1616 = vadd.f32 %v1319, %v1574
      %v1617 = vadd.f32 %v1320, %v1478
      %v1618 = vadd.f32 %v1321, %v1527
      %v1619 = vadd.f32 %v1322, %v1576
      %v1620 = vadd.f32 %v1323, %v1481
      %v1621 = vadd.f32 %v1324, %v1530
      %v1622 = vadd.f32 %v1325, %v1579
      %v1623 = vadd.f32 %v1326, %v1483
      %v1624 = vadd.f32 %v1327, %v1532
      %v1625 = vadd.f32 %v1328, %v1581
      %v1626 = vadd.f32 %v1329, %v1486
      %v1627 = vadd.f32 %v1330, %v1535
      %v1628 = vadd.f32 %v1331, %v1584
      %v1629 = vadd.f32 %v1332, %v1488
      %v1630 = vadd.f32 %v1333, %v1537
      %v1631 = vadd.f32 %v1334, %v1586
      %v1632 = vadd.f32 %v1335, %v1491
      %v1633 = vadd.f32 %v1336, %v1540
      %v1634 = vadd.f32 %v1337, %v1589
      %v1635 = vadd.f32 %v1338, %v1493
      %v1636 = vadd.f32 %v1339, %v1542
      %v1637 = vadd.f32 %v1340, %v1591
      %v1638 = vadd.f32 %v1341, %v1496
      %v1639 = vadd.f32 %v1342, %v1545
      %v1640 = vadd.f32 %v1343, %v1594
      %v1641 = vadd.f32 %v1344, %v1498
      %v1642 = vadd.f32 %v1345, %v1547
      %v1643 = vadd.f32 %v1346, %v1596
      %v1644 = vadd.f32 %v1347, %v1501
      %v1645 = vadd.f32 %v1348, %v1550
      %v1646 = vadd.f32 %v1349, %v1599
      %v1647 = vadd.f32 %v1350, %v1503
      %v1648 = vadd.f32 %v1351, %v1552
      %v1649 = vadd.f32 %v1352, %v1601
      %v1650 = vadd.f32 %v1353, %v1506
      %v1651 = vadd.f32 %v1354, %v1555
      %v1652 = vadd.f32 %v1355, %v1604
      %v1653 = vadd.f32 %v1356, %v1508
      %v1654 = vadd.f32 %v1357, %v1557
      %v1655 = vadd.f32 %v1358, %v1606
      %s1656 = scalar_lea.vmem %s245, 320
      %v1657 = vld [vmem:[%s1656] sm:$0xf]
      %v1658 = vld [vmem:[%s1656 + $0x4] sm:$0xf]
      %v1659 = vld [vmem:[%s1656 + $0x8] sm:$0xf]
      %v1660 = vld [vmem:[%s1656 + $0xc] sm:$0xf]
      %v1661 = vld [vmem:[%s1656 + $0x10] sm:$0xf]
      %v1662 = vld [vmem:[%s1656 + $0x14] sm:$0xf]
      %v1663 = vld [vmem:[%s1656 + $0x18] sm:$0xf]
      %v1664 = vld [vmem:[%s1656 + $0x1c] sm:$0xf]
      %v1665 = vld [vmem:[%s1656 + $0x20] sm:$0xf]
      %v1666 = vld [vmem:[%s1656 + $0x24] sm:$0xf]
      %v1667 = vld [vmem:[%s1656 + $0x28] sm:$0xf]
      %v1668 = vld [vmem:[%s1656 + $0x2c] sm:$0xf]
      %v1669 = vld [vmem:[%s1656 + $0x30] sm:$0xf]
      %v1670 = vld [vmem:[%s1656 + $0x34] sm:$0xf]
      %v1671 = vld [vmem:[%s1656 + $0x38] sm:$0xf]
      %v1672 = vld [vmem:[%s1656 + $0x3c] sm:$0xf]
      %v1689 = vunpack.c.l.b16 %v1657
      %v1690 = vunpack.c.l.b16 %v1658
      %v1691 = vunpack.c.l.b16 %v1659
      %v1692 = vunpack.c.l.b16 %v1660
      %v1693 = vunpack.c.l.b16 %v1661
      %v1694 = vunpack.c.l.b16 %v1662
      %v1695 = vunpack.c.l.b16 %v1663
      %v1696 = vunpack.c.l.b16 %v1664
      %v1697 = vunpack.c.l.b16 %v1665
      %v1698 = vunpack.c.l.b16 %v1666
      %v1699 = vunpack.c.l.b16 %v1667
      %v1700 = vunpack.c.l.b16 %v1668
      %v1701 = vunpack.c.l.b16 %v1669
      %v1702 = vunpack.c.l.b16 %v1670
      %v1703 = vunpack.c.l.b16 %v1671
      %v1704 = vunpack.c.l.b16 %v1672
      %v1705 = vpack.c.b16 %v1690, %v1689
      %v1706 = vpack.c.b16 %v1692, %v1691
      %v1707 = vpack.c.b16 %v1694, %v1693
      %v1708 = vpack.c.b16 %v1696, %v1695
      %v1709 = vpack.c.b16 %v1698, %v1697
      %v1710 = vpack.c.b16 %v1700, %v1699
      %v1711 = vpack.c.b16 %v1702, %v1701
      %v1712 = vpack.c.b16 %v1704, %v1703
      %1713 = vrot.lane.b32.xlu0 %v347, 108
      %v1714 = vpop.permute.xlu0 %1713
      %1715 = vrot.lane.b32.xlu0 %v348, 108
      %v1716 = vpop.permute.xlu0 %1715
      %1717 = vrot.lane.b32.xlu0 %v349, 108
      %v1718 = vpop.permute.xlu0 %1717
      %1719 = vrot.lane.b32.xlu0 %v350, 108
      %v1720 = vpop.permute.xlu0 %1719
      %vm1721 = vcmask 883712
      %v1722 = vsel %vm1721, %v1714, %v1716
      %v1723 = vsel %vm1721, %v1716, %v1718
      %v1724 = vsel %vm1721, %v1718, %v1720
      %v1726 = vsel %vm363, %v1705, 0
      %v1729 = vsel %vm363, %v1706, 0
      %v1732 = vsel %vm363, %v1707, 0
      %v1735 = vsel %vm363, %v1708, 0
      %v1738 = vsel %vm363, %v1709, 0
      %v1741 = vsel %vm363, %v1710, 0
      %v1744 = vsel %vm363, %v1711, 0
      %v1747 = vsel %vm363, %v1712, 0
      %v1750 = vsel %vm388, %v1722, 0
      %v1753 = vsel %vm388, %v1723, 0
      %v1756 = vsel %vm388, %v1724, 0
      %1758 = vmatpush.bf16.msra.mxu0 0
      %1759 = vmatpush.bf16.msra.mxu0 0
      %1760 = vmatpush.bf16.msra.mxu0 0
      %1761 = vmatpush.bf16.msra.mxu0 0
      %1762 = vmatpush.bf16.msra.mxu0 0
      %1763 = vmatpush.bf16.msra.mxu0 0
      %1764 = vmatpush.bf16.msra.mxu0 0
      %1765 = vmatpush.bf16.msra.mxu0 %v1750
      %1766 = vmatmul.bf16.gmra.mxu0 %v1726
      %v1767 = vpop.f32.mrf.mxu0
      %v1768 = vadd.f32 0.0, %v1767
      %v1769 = vpop.f32.mrf.mxu0
      %v1770 = vadd.f32 0.0, %v1769
      %1771 = vmatmul.bf16.gmra.mxu0 %v1729
      %v1772 = vpop.f32.mrf.mxu0
      %v1773 = vadd.f32 0.0, %v1772
      %v1774 = vpop.f32.mrf.mxu0
      %v1775 = vadd.f32 0.0, %v1774
      %1776 = vmatmul.bf16.gmra.mxu0 %v1732
      %v1777 = vpop.f32.mrf.mxu0
      %v1778 = vadd.f32 0.0, %v1777
      %v1779 = vpop.f32.mrf.mxu0
      %v1780 = vadd.f32 0.0, %v1779
      %1781 = vmatmul.bf16.gmra.mxu0 %v1735
      %v1782 = vpop.f32.mrf.mxu0
      %v1783 = vadd.f32 0.0, %v1782
      %v1784 = vpop.f32.mrf.mxu0
      %v1785 = vadd.f32 0.0, %v1784
      %1786 = vmatmul.bf16.gmra.mxu0 %v1738
      %v1787 = vpop.f32.mrf.mxu0
      %v1788 = vadd.f32 0.0, %v1787
      %v1789 = vpop.f32.mrf.mxu0
      %v1790 = vadd.f32 0.0, %v1789
      %1791 = vmatmul.bf16.gmra.mxu0 %v1741
      %v1792 = vpop.f32.mrf.mxu0
      %v1793 = vadd.f32 0.0, %v1792
      %v1794 = vpop.f32.mrf.mxu0
      %v1795 = vadd.f32 0.0, %v1794
      %1796 = vmatmul.bf16.gmra.mxu0 %v1744
      %v1797 = vpop.f32.mrf.mxu0
      %v1798 = vadd.f32 0.0, %v1797
      %v1799 = vpop.f32.mrf.mxu0
      %v1800 = vadd.f32 0.0, %v1799
      %1801 = vmatmul.bf16.gmra.mxu0 %v1747
      %v1802 = vpop.f32.mrf.mxu0
      %v1803 = vadd.f32 0.0, %v1802
      %v1804 = vpop.f32.mrf.mxu0
      %v1805 = vadd.f32 0.0, %v1804
      %1806 = vdwg.mxu0
      %1807 = vmatpush.bf16.msra.mxu0 0
      %1808 = vmatpush.bf16.msra.mxu0 0
      %1809 = vmatpush.bf16.msra.mxu0 0
      %1810 = vmatpush.bf16.msra.mxu0 0
      %1811 = vmatpush.bf16.msra.mxu0 0
      %1812 = vmatpush.bf16.msra.mxu0 0
      %1813 = vmatpush.bf16.msra.mxu0 0
      %1814 = vmatpush.bf16.msra.mxu0 %v1753
      %1815 = vmatmul.bf16.gmra.mxu0 %v1726
      %v1816 = vpop.f32.mrf.mxu0
      %v1817 = vadd.f32 0.0, %v1816
      %v1818 = vpop.f32.mrf.mxu0
      %v1819 = vadd.f32 0.0, %v1818
      %1820 = vmatmul.bf16.gmra.mxu0 %v1729
      %v1821 = vpop.f32.mrf.mxu0
      %v1822 = vadd.f32 0.0, %v1821
      %v1823 = vpop.f32.mrf.mxu0
      %v1824 = vadd.f32 0.0, %v1823
      %1825 = vmatmul.bf16.gmra.mxu0 %v1732
      %v1826 = vpop.f32.mrf.mxu0
      %v1827 = vadd.f32 0.0, %v1826
      %v1828 = vpop.f32.mrf.mxu0
      %v1829 = vadd.f32 0.0, %v1828
      %1830 = vmatmul.bf16.gmra.mxu0 %v1735
      %v1831 = vpop.f32.mrf.mxu0
      %v1832 = vadd.f32 0.0, %v1831
      %v1833 = vpop.f32.mrf.mxu0
      %v1834 = vadd.f32 0.0, %v1833
      %1835 = vmatmul.bf16.gmra.mxu0 %v1738
      %v1836 = vpop.f32.mrf.mxu0
      %v1837 = vadd.f32 0.0, %v1836
      %v1838 = vpop.f32.mrf.mxu0
      %v1839 = vadd.f32 0.0, %v1838
      %1840 = vmatmul.bf16.gmra.mxu0 %v1741
      %v1841 = vpop.f32.mrf.mxu0
      %v1842 = vadd.f32 0.0, %v1841
      %v1843 = vpop.f32.mrf.mxu0
      %v1844 = vadd.f32 0.0, %v1843
      %1845 = vmatmul.bf16.gmra.mxu0 %v1744
      %v1846 = vpop.f32.mrf.mxu0
      %v1847 = vadd.f32 0.0, %v1846
      %v1848 = vpop.f32.mrf.mxu0
      %v1849 = vadd.f32 0.0, %v1848
      %1850 = vmatmul.bf16.gmra.mxu0 %v1747
      %v1851 = vpop.f32.mrf.mxu0
      %v1852 = vadd.f32 0.0, %v1851
      %v1853 = vpop.f32.mrf.mxu0
      %v1854 = vadd.f32 0.0, %v1853
      %1855 = vdwg.mxu0
      %1856 = vmatpush.bf16.msra.mxu0 0
      %1857 = vmatpush.bf16.msra.mxu0 0
      %1858 = vmatpush.bf16.msra.mxu0 0
      %1859 = vmatpush.bf16.msra.mxu0 0
      %1860 = vmatpush.bf16.msra.mxu0 0
      %1861 = vmatpush.bf16.msra.mxu0 0
      %1862 = vmatpush.bf16.msra.mxu0 0
      %1863 = vmatpush.bf16.msra.mxu0 %v1756
      %1864 = vmatmul.bf16.gmra.mxu0 %v1726
      %v1865 = vpop.f32.mrf.mxu0
      %v1866 = vadd.f32 0.0, %v1865
      %v1867 = vpop.f32.mrf.mxu0
      %v1868 = vadd.f32 0.0, %v1867
      %1869 = vmatmul.bf16.gmra.mxu0 %v1729
      %v1870 = vpop.f32.mrf.mxu0
      %v1871 = vadd.f32 0.0, %v1870
      %v1872 = vpop.f32.mrf.mxu0
      %v1873 = vadd.f32 0.0, %v1872
      %1874 = vmatmul.bf16.gmra.mxu0 %v1732
      %v1875 = vpop.f32.mrf.mxu0
      %v1876 = vadd.f32 0.0, %v1875
      %v1877 = vpop.f32.mrf.mxu0
      %v1878 = vadd.f32 0.0, %v1877
      %1879 = vmatmul.bf16.gmra.mxu0 %v1735
      %v1880 = vpop.f32.mrf.mxu0
      %v1881 = vadd.f32 0.0, %v1880
      %v1882 = vpop.f32.mrf.mxu0
      %v1883 = vadd.f32 0.0, %v1882
      %1884 = vmatmul.bf16.gmra.mxu0 %v1738
      %v1885 = vpop.f32.mrf.mxu0
      %v1886 = vadd.f32 0.0, %v1885
      %v1887 = vpop.f32.mrf.mxu0
      %v1888 = vadd.f32 0.0, %v1887
      %1889 = vmatmul.bf16.gmra.mxu0 %v1741
      %v1890 = vpop.f32.mrf.mxu0
      %v1891 = vadd.f32 0.0, %v1890
      %v1892 = vpop.f32.mrf.mxu0
      %v1893 = vadd.f32 0.0, %v1892
      %1894 = vmatmul.bf16.gmra.mxu0 %v1744
      %v1895 = vpop.f32.mrf.mxu0
      %v1896 = vadd.f32 0.0, %v1895
      %v1897 = vpop.f32.mrf.mxu0
      %v1898 = vadd.f32 0.0, %v1897
      %1899 = vmatmul.bf16.gmra.mxu0 %v1747
      %v1900 = vpop.f32.mrf.mxu0
      %v1901 = vadd.f32 0.0, %v1900
      %v1902 = vpop.f32.mrf.mxu0
      %v1903 = vadd.f32 0.0, %v1902
      %1904 = vdwg.mxu0
      %v1905 = vadd.f32 %v1608, %v1768
      %v1906 = vadd.f32 %v1609, %v1817
      %v1907 = vadd.f32 %v1610, %v1866
      %v1908 = vadd.f32 %v1611, %v1770
      %v1909 = vadd.f32 %v1612, %v1819
      %v1910 = vadd.f32 %v1613, %v1868
      %v1911 = vadd.f32 %v1614, %v1773
      %v1912 = vadd.f32 %v1615, %v1822
      %v1913 = vadd.f32 %v1616, %v1871
      %v1914 = vadd.f32 %v1617, %v1775
      %v1915 = vadd.f32 %v1618, %v1824
      %v1916 = vadd.f32 %v1619, %v1873
      %v1917 = vadd.f32 %v1620, %v1778
      %v1918 = vadd.f32 %v1621, %v1827
      %v1919 = vadd.f32 %v1622, %v1876
      %v1920 = vadd.f32 %v1623, %v1780
      %v1921 = vadd.f32 %v1624, %v1829
      %v1922 = vadd.f32 %v1625, %v1878
      %v1923 = vadd.f32 %v1626, %v1783
      %v1924 = vadd.f32 %v1627, %v1832
      %v1925 = vadd.f32 %v1628, %v1881
      %v1926 = vadd.f32 %v1629, %v1785
      %v1927 = vadd.f32 %v1630, %v1834
      %v1928 = vadd.f32 %v1631, %v1883
      %v1929 = vadd.f32 %v1632, %v1788
      %v1930 = vadd.f32 %v1633, %v1837
      %v1931 = vadd.f32 %v1634, %v1886
      %v1932 = vadd.f32 %v1635, %v1790
      %v1933 = vadd.f32 %v1636, %v1839
      %v1934 = vadd.f32 %v1637, %v1888
      %v1935 = vadd.f32 %v1638, %v1793
      %v1936 = vadd.f32 %v1639, %v1842
      %v1937 = vadd.f32 %v1640, %v1891
      %v1938 = vadd.f32 %v1641, %v1795
      %v1939 = vadd.f32 %v1642, %v1844
      %v1940 = vadd.f32 %v1643, %v1893
      %v1941 = vadd.f32 %v1644, %v1798
      %v1942 = vadd.f32 %v1645, %v1847
      %v1943 = vadd.f32 %v1646, %v1896
      %v1944 = vadd.f32 %v1647, %v1800
      %v1945 = vadd.f32 %v1648, %v1849
      %v1946 = vadd.f32 %v1649, %v1898
      %v1947 = vadd.f32 %v1650, %v1803
      %v1948 = vadd.f32 %v1651, %v1852
      %v1949 = vadd.f32 %v1652, %v1901
      %v1950 = vadd.f32 %v1653, %v1805
      %v1951 = vadd.f32 %v1654, %v1854
      %v1952 = vadd.f32 %v1655, %v1903
      %s1953 = scalar_lea.vmem %s245, 384
      %v1954 = vld [vmem:[%s1953] sm:$0xf]
      %v1955 = vld [vmem:[%s1953 + $0x4] sm:$0xf]
      %v1956 = vld [vmem:[%s1953 + $0x8] sm:$0xf]
      %v1957 = vld [vmem:[%s1953 + $0xc] sm:$0xf]
      %v1958 = vld [vmem:[%s1953 + $0x10] sm:$0xf]
      %v1959 = vld [vmem:[%s1953 + $0x14] sm:$0xf]
      %v1960 = vld [vmem:[%s1953 + $0x18] sm:$0xf]
      %v1961 = vld [vmem:[%s1953 + $0x1c] sm:$0xf]
      %v1962 = vld [vmem:[%s1953 + $0x20] sm:$0xf]
      %v1963 = vld [vmem:[%s1953 + $0x24] sm:$0xf]
      %v1964 = vld [vmem:[%s1953 + $0x28] sm:$0xf]
      %v1965 = vld [vmem:[%s1953 + $0x2c] sm:$0xf]
      %v1966 = vld [vmem:[%s1953 + $0x30] sm:$0xf]
      %v1967 = vld [vmem:[%s1953 + $0x34] sm:$0xf]
      %v1968 = vld [vmem:[%s1953 + $0x38] sm:$0xf]
      %v1969 = vld [vmem:[%s1953 + $0x3c] sm:$0xf]
      %v1986 = vunpack.c.l.b16 %v1954
      %v1987 = vunpack.c.l.b16 %v1955
      %v1988 = vunpack.c.l.b16 %v1956
      %v1989 = vunpack.c.l.b16 %v1957
      %v1990 = vunpack.c.l.b16 %v1958
      %v1991 = vunpack.c.l.b16 %v1959
      %v1992 = vunpack.c.l.b16 %v1960
      %v1993 = vunpack.c.l.b16 %v1961
      %v1994 = vunpack.c.l.b16 %v1962
      %v1995 = vunpack.c.l.b16 %v1963
      %v1996 = vunpack.c.l.b16 %v1964
      %v1997 = vunpack.c.l.b16 %v1965
      %v1998 = vunpack.c.l.b16 %v1966
      %v1999 = vunpack.c.l.b16 %v1967
      %v2000 = vunpack.c.l.b16 %v1968
      %v2001 = vunpack.c.l.b16 %v1969
      %v2002 = vpack.c.b16 %v1987, %v1986
      %v2003 = vpack.c.b16 %v1989, %v1988
      %v2004 = vpack.c.b16 %v1991, %v1990
      %v2005 = vpack.c.b16 %v1993, %v1992
      %v2006 = vpack.c.b16 %v1995, %v1994
      %v2007 = vpack.c.b16 %v1997, %v1996
      %v2008 = vpack.c.b16 %v1999, %v1998
      %v2009 = vpack.c.b16 %v2001, %v2000
      %2010 = vrot.lane.b32.xlu0 %v347, 92
      %v2011 = vpop.permute.xlu0 %2010
      %2012 = vrot.lane.b32.xlu0 %v348, 92
      %v2013 = vpop.permute.xlu0 %2012
      %2014 = vrot.lane.b32.xlu0 %v349, 92
      %v2015 = vpop.permute.xlu0 %2014
      %2016 = vrot.lane.b32.xlu0 %v350, 92
      %v2017 = vpop.permute.xlu0 %2016
      %vm2018 = vcmask 752640
      %v2019 = vsel %vm2018, %v2011, %v2013
      %v2020 = vsel %vm2018, %v2013, %v2015
      %v2021 = vsel %vm2018, %v2015, %v2017
      %v2023 = vsel %vm363, %v2002, 0
      %v2026 = vsel %vm363, %v2003, 0
      %v2029 = vsel %vm363, %v2004, 0
      %v2032 = vsel %vm363, %v2005, 0
      %v2035 = vsel %vm363, %v2006, 0
      %v2038 = vsel %vm363, %v2007, 0
      %v2041 = vsel %vm363, %v2008, 0
      %v2044 = vsel %vm363, %v2009, 0
      %v2047 = vsel %vm388, %v2019, 0
      %v2050 = vsel %vm388, %v2020, 0
      %v2053 = vsel %vm388, %v2021, 0
      %2055 = vmatpush.bf16.msra.mxu0 0
      %2056 = vmatpush.bf16.msra.mxu0 0
      %2057 = vmatpush.bf16.msra.mxu0 0
      %2058 = vmatpush.bf16.msra.mxu0 0
      %2059 = vmatpush.bf16.msra.mxu0 0
      %2060 = vmatpush.bf16.msra.mxu0 0
      %2061 = vmatpush.bf16.msra.mxu0 0
      %2062 = vmatpush.bf16.msra.mxu0 %v2047
      %2063 = vmatmul.bf16.gmra.mxu0 %v2023
      %v2064 = vpop.f32.mrf.mxu0
      %v2065 = vadd.f32 0.0, %v2064
      %v2066 = vpop.f32.mrf.mxu0
      %v2067 = vadd.f32 0.0, %v2066
      %2068 = vmatmul.bf16.gmra.mxu0 %v2026
      %v2069 = vpop.f32.mrf.mxu0
      %v2070 = vadd.f32 0.0, %v2069
      %v2071 = vpop.f32.mrf.mxu0
      %v2072 = vadd.f32 0.0, %v2071
      %2073 = vmatmul.bf16.gmra.mxu0 %v2029
      %v2074 = vpop.f32.mrf.mxu0
      %v2075 = vadd.f32 0.0, %v2074
      %v2076 = vpop.f32.mrf.mxu0
      %v2077 = vadd.f32 0.0, %v2076
      %2078 = vmatmul.bf16.gmra.mxu0 %v2032
      %v2079 = vpop.f32.mrf.mxu0
      %v2080 = vadd.f32 0.0, %v2079
      %v2081 = vpop.f32.mrf.mxu0
      %v2082 = vadd.f32 0.0, %v2081
      %2083 = vmatmul.bf16.gmra.mxu0 %v2035
      %v2084 = vpop.f32.mrf.mxu0
      %v2085 = vadd.f32 0.0, %v2084
      %v2086 = vpop.f32.mrf.mxu0
      %v2087 = vadd.f32 0.0, %v2086
      %2088 = vmatmul.bf16.gmra.mxu0 %v2038
      %v2089 = vpop.f32.mrf.mxu0
      %v2090 = vadd.f32 0.0, %v2089
      %v2091 = vpop.f32.mrf.mxu0
      %v2092 = vadd.f32 0.0, %v2091
      %2093 = vmatmul.bf16.gmra.mxu0 %v2041
      %v2094 = vpop.f32.mrf.mxu0
      %v2095 = vadd.f32 0.0, %v2094
      %v2096 = vpop.f32.mrf.mxu0
      %v2097 = vadd.f32 0.0, %v2096
      %2098 = vmatmul.bf16.gmra.mxu0 %v2044
      %v2099 = vpop.f32.mrf.mxu0
      %v2100 = vadd.f32 0.0, %v2099
      %v2101 = vpop.f32.mrf.mxu0
      %v2102 = vadd.f32 0.0, %v2101
      %2103 = vdwg.mxu0
      %2104 = vmatpush.bf16.msra.mxu0 0
      %2105 = vmatpush.bf16.msra.mxu0 0
      %2106 = vmatpush.bf16.msra.mxu0 0
      %2107 = vmatpush.bf16.msra.mxu0 0
      %2108 = vmatpush.bf16.msra.mxu0 0
      %2109 = vmatpush.bf16.msra.mxu0 0
      %2110 = vmatpush.bf16.msra.mxu0 0
      %2111 = vmatpush.bf16.msra.mxu0 %v2050
      %2112 = vmatmul.bf16.gmra.mxu0 %v2023
      %v2113 = vpop.f32.mrf.mxu0
      %v2114 = vadd.f32 0.0, %v2113
      %v2115 = vpop.f32.mrf.mxu0
      %v2116 = vadd.f32 0.0, %v2115
      %2117 = vmatmul.bf16.gmra.mxu0 %v2026
      %v2118 = vpop.f32.mrf.mxu0
      %v2119 = vadd.f32 0.0, %v2118
      %v2120 = vpop.f32.mrf.mxu0
      %v2121 = vadd.f32 0.0, %v2120
      %2122 = vmatmul.bf16.gmra.mxu0 %v2029
      %v2123 = vpop.f32.mrf.mxu0
      %v2124 = vadd.f32 0.0, %v2123
      %v2125 = vpop.f32.mrf.mxu0
      %v2126 = vadd.f32 0.0, %v2125
      %2127 = vmatmul.bf16.gmra.mxu0 %v2032
      %v2128 = vpop.f32.mrf.mxu0
      %v2129 = vadd.f32 0.0, %v2128
      %v2130 = vpop.f32.mrf.mxu0
      %v2131 = vadd.f32 0.0, %v2130
      %2132 = vmatmul.bf16.gmra.mxu0 %v2035
      %v2133 = vpop.f32.mrf.mxu0
      %v2134 = vadd.f32 0.0, %v2133
      %v2135 = vpop.f32.mrf.mxu0
      %v2136 = vadd.f32 0.0, %v2135
      %2137 = vmatmul.bf16.gmra.mxu0 %v2038
      %v2138 = vpop.f32.mrf.mxu0
      %v2139 = vadd.f32 0.0, %v2138
      %v2140 = vpop.f32.mrf.mxu0
      %v2141 = vadd.f32 0.0, %v2140
      %2142 = vmatmul.bf16.gmra.mxu0 %v2041
      %v2143 = vpop.f32.mrf.mxu0
      %v2144 = vadd.f32 0.0, %v2143
      %v2145 = vpop.f32.mrf.mxu0
      %v2146 = vadd.f32 0.0, %v2145
      %2147 = vmatmul.bf16.gmra.mxu0 %v2044
      %v2148 = vpop.f32.mrf.mxu0
      %v2149 = vadd.f32 0.0, %v2148
      %v2150 = vpop.f32.mrf.mxu0
      %v2151 = vadd.f32 0.0, %v2150
      %2152 = vdwg.mxu0
      %2153 = vmatpush.bf16.msra.mxu0 0
      %2154 = vmatpush.bf16.msra.mxu0 0
      %2155 = vmatpush.bf16.msra.mxu0 0
      %2156 = vmatpush.bf16.msra.mxu0 0
      %2157 = vmatpush.bf16.msra.mxu0 0
      %2158 = vmatpush.bf16.msra.mxu0 0
      %2159 = vmatpush.bf16.msra.mxu0 0
      %2160 = vmatpush.bf16.msra.mxu0 %v2053
      %2161 = vmatmul.bf16.gmra.mxu0 %v2023
      %v2162 = vpop.f32.mrf.mxu0
      %v2163 = vadd.f32 0.0, %v2162
      %v2164 = vpop.f32.mrf.mxu0
      %v2165 = vadd.f32 0.0, %v2164
      %2166 = vmatmul.bf16.gmra.mxu0 %v2026
      %v2167 = vpop.f32.mrf.mxu0
      %v2168 = vadd.f32 0.0, %v2167
      %v2169 = vpop.f32.mrf.mxu0
      %v2170 = vadd.f32 0.0, %v2169
      %2171 = vmatmul.bf16.gmra.mxu0 %v2029
      %v2172 = vpop.f32.mrf.mxu0
      %v2173 = vadd.f32 0.0, %v2172
      %v2174 = vpop.f32.mrf.mxu0
      %v2175 = vadd.f32 0.0, %v2174
      %2176 = vmatmul.bf16.gmra.mxu0 %v2032
      %v2177 = vpop.f32.mrf.mxu0
      %v2178 = vadd.f32 0.0, %v2177
      %v2179 = vpop.f32.mrf.mxu0
      %v2180 = vadd.f32 0.0, %v2179
      %2181 = vmatmul.bf16.gmra.mxu0 %v2035
      %v2182 = vpop.f32.mrf.mxu0
      %v2183 = vadd.f32 0.0, %v2182
      %v2184 = vpop.f32.mrf.mxu0
      %v2185 = vadd.f32 0.0, %v2184
      %2186 = vmatmul.bf16.gmra.mxu0 %v2038
      %v2187 = vpop.f32.mrf.mxu0
      %v2188 = vadd.f32 0.0, %v2187
      %v2189 = vpop.f32.mrf.mxu0
      %v2190 = vadd.f32 0.0, %v2189
      %2191 = vmatmul.bf16.gmra.mxu0 %v2041
      %v2192 = vpop.f32.mrf.mxu0
      %v2193 = vadd.f32 0.0, %v2192
      %v2194 = vpop.f32.mrf.mxu0
      %v2195 = vadd.f32 0.0, %v2194
      %2196 = vmatmul.bf16.gmra.mxu0 %v2044
      %v2197 = vpop.f32.mrf.mxu0
      %v2198 = vadd.f32 0.0, %v2197
      %v2199 = vpop.f32.mrf.mxu0
      %v2200 = vadd.f32 0.0, %v2199
      %2201 = vdwg.mxu0
      %v2202 = vadd.f32 %v1905, %v2065
      %v2203 = vadd.f32 %v1906, %v2114
      %v2204 = vadd.f32 %v1907, %v2163
      %v2205 = vadd.f32 %v1908, %v2067
      %v2206 = vadd.f32 %v1909, %v2116
      %v2207 = vadd.f32 %v1910, %v2165
      %v2208 = vadd.f32 %v1911, %v2070
      %v2209 = vadd.f32 %v1912, %v2119
      %v2210 = vadd.f32 %v1913, %v2168
      %v2211 = vadd.f32 %v1914, %v2072
      %v2212 = vadd.f32 %v1915, %v2121
      %v2213 = vadd.f32 %v1916, %v2170
      %v2214 = vadd.f32 %v1917, %v2075
      %v2215 = vadd.f32 %v1918, %v2124
      %v2216 = vadd.f32 %v1919, %v2173
      %v2217 = vadd.f32 %v1920, %v2077
      %v2218 = vadd.f32 %v1921, %v2126
      %v2219 = vadd.f32 %v1922, %v2175
      %v2220 = vadd.f32 %v1923, %v2080
      %v2221 = vadd.f32 %v1924, %v2129
      %v2222 = vadd.f32 %v1925, %v2178
      %v2223 = vadd.f32 %v1926, %v2082
      %v2224 = vadd.f32 %v1927, %v2131
      %v2225 = vadd.f32 %v1928, %v2180
      %v2226 = vadd.f32 %v1929, %v2085
      %v2227 = vadd.f32 %v1930, %v2134
      %v2228 = vadd.f32 %v1931, %v2183
      %v2229 = vadd.f32 %v1932, %v2087
      %v2230 = vadd.f32 %v1933, %v2136
      %v2231 = vadd.f32 %v1934, %v2185
      %v2232 = vadd.f32 %v1935, %v2090
      %v2233 = vadd.f32 %v1936, %v2139
      %v2234 = vadd.f32 %v1937, %v2188
      %v2235 = vadd.f32 %v1938, %v2092
      %v2236 = vadd.f32 %v1939, %v2141
      %v2237 = vadd.f32 %v1940, %v2190
      %v2238 = vadd.f32 %v1941, %v2095
      %v2239 = vadd.f32 %v1942, %v2144
      %v2240 = vadd.f32 %v1943, %v2193
      %v2241 = vadd.f32 %v1944, %v2097
      %v2242 = vadd.f32 %v1945, %v2146
      %v2243 = vadd.f32 %v1946, %v2195
      %v2244 = vadd.f32 %v1947, %v2100
      %v2245 = vadd.f32 %v1948, %v2149
      %v2246 = vadd.f32 %v1949, %v2198
      %v2247 = vadd.f32 %v1950, %v2102
      %v2248 = vadd.f32 %v1951, %v2151
      %v2249 = vadd.f32 %v1952, %v2200
      %s2250 = scalar_lea.vmem %s245, 448
      %v2251 = vld [vmem:[%s2250] sm:$0xf]
      %v2252 = vld [vmem:[%s2250 + $0x4] sm:$0xf]
      %v2253 = vld [vmem:[%s2250 + $0x8] sm:$0xf]
      %v2254 = vld [vmem:[%s2250 + $0xc] sm:$0xf]
      %v2255 = vld [vmem:[%s2250 + $0x10] sm:$0xf]
      %v2256 = vld [vmem:[%s2250 + $0x14] sm:$0xf]
      %v2257 = vld [vmem:[%s2250 + $0x18] sm:$0xf]
      %v2258 = vld [vmem:[%s2250 + $0x1c] sm:$0xf]
      %v2259 = vld [vmem:[%s2250 + $0x20] sm:$0xf]
      %v2260 = vld [vmem:[%s2250 + $0x24] sm:$0xf]
      %v2261 = vld [vmem:[%s2250 + $0x28] sm:$0xf]
      %v2262 = vld [vmem:[%s2250 + $0x2c] sm:$0xf]
      %v2263 = vld [vmem:[%s2250 + $0x30] sm:$0xf]
      %v2264 = vld [vmem:[%s2250 + $0x34] sm:$0xf]
      %v2265 = vld [vmem:[%s2250 + $0x38] sm:$0xf]
      %v2266 = vld [vmem:[%s2250 + $0x3c] sm:$0xf]
      %v2283 = vunpack.c.l.b16 %v2251
      %v2284 = vunpack.c.l.b16 %v2252
      %v2285 = vunpack.c.l.b16 %v2253
      %v2286 = vunpack.c.l.b16 %v2254
      %v2287 = vunpack.c.l.b16 %v2255
      %v2288 = vunpack.c.l.b16 %v2256
      %v2289 = vunpack.c.l.b16 %v2257
      %v2290 = vunpack.c.l.b16 %v2258
      %v2291 = vunpack.c.l.b16 %v2259
      %v2292 = vunpack.c.l.b16 %v2260
      %v2293 = vunpack.c.l.b16 %v2261
      %v2294 = vunpack.c.l.b16 %v2262
      %v2295 = vunpack.c.l.b16 %v2263
      %v2296 = vunpack.c.l.b16 %v2264
      %v2297 = vunpack.c.l.b16 %v2265
      %v2298 = vunpack.c.l.b16 %v2266
      %v2299 = vpack.c.b16 %v2284, %v2283
      %v2300 = vpack.c.b16 %v2286, %v2285
      %v2301 = vpack.c.b16 %v2288, %v2287
      %v2302 = vpack.c.b16 %v2290, %v2289
      %v2303 = vpack.c.b16 %v2292, %v2291
      %v2304 = vpack.c.b16 %v2294, %v2293
      %v2305 = vpack.c.b16 %v2296, %v2295
      %v2306 = vpack.c.b16 %v2298, %v2297
      %2307 = vrot.lane.b32.xlu0 %v347, 91
      %v2308 = vpop.permute.xlu0 %2307
      %2309 = vrot.lane.b32.xlu0 %v348, 91
      %v2310 = vpop.permute.xlu0 %2309
      %2311 = vrot.lane.b32.xlu0 %v349, 91
      %v2312 = vpop.permute.xlu0 %2311
      %2313 = vrot.lane.b32.xlu0 %v350, 91
      %v2314 = vpop.permute.xlu0 %2313
      %vm2315 = vcmask 744448
      %v2316 = vsel %vm2315, %v2308, %v2310
      %v2317 = vsel %vm2315, %v2310, %v2312
      %v2318 = vsel %vm2315, %v2312, %v2314
      %v2320 = vsel %vm363, %v2299, 0
      %v2323 = vsel %vm363, %v2300, 0
      %v2326 = vsel %vm363, %v2301, 0
      %v2329 = vsel %vm363, %v2302, 0
      %v2332 = vsel %vm363, %v2303, 0
      %v2335 = vsel %vm363, %v2304, 0
      %v2338 = vsel %vm363, %v2305, 0
      %v2341 = vsel %vm363, %v2306, 0
      %v2344 = vsel %vm388, %v2316, 0
      %v2347 = vsel %vm388, %v2317, 0
      %v2350 = vsel %vm388, %v2318, 0
      %2352 = vmatpush.bf16.msra.mxu0 0
      %2353 = vmatpush.bf16.msra.mxu0 0
      %2354 = vmatpush.bf16.msra.mxu0 0
      %2355 = vmatpush.bf16.msra.mxu0 0
      %2356 = vmatpush.bf16.msra.mxu0 0
      %2357 = vmatpush.bf16.msra.mxu0 0
      %2358 = vmatpush.bf16.msra.mxu0 0
      %2359 = vmatpush.bf16.msra.mxu0 %v2344
      %2360 = vmatmul.bf16.gmra.mxu0 %v2320
      %v2361 = vpop.f32.mrf.mxu0
      %v2362 = vadd.f32 0.0, %v2361
      %v2363 = vpop.f32.mrf.mxu0
      %v2364 = vadd.f32 0.0, %v2363
      %2365 = vmatmul.bf16.gmra.mxu0 %v2323
      %v2366 = vpop.f32.mrf.mxu0
      %v2367 = vadd.f32 0.0, %v2366
      %v2368 = vpop.f32.mrf.mxu0
      %v2369 = vadd.f32 0.0, %v2368
      %2370 = vmatmul.bf16.gmra.mxu0 %v2326
      %v2371 = vpop.f32.mrf.mxu0
      %v2372 = vadd.f32 0.0, %v2371
      %v2373 = vpop.f32.mrf.mxu0
      %v2374 = vadd.f32 0.0, %v2373
      %2375 = vmatmul.bf16.gmra.mxu0 %v2329
      %v2376 = vpop.f32.mrf.mxu0
      %v2377 = vadd.f32 0.0, %v2376
      %v2378 = vpop.f32.mrf.mxu0
      %v2379 = vadd.f32 0.0, %v2378
      %2380 = vmatmul.bf16.gmra.mxu0 %v2332
      %v2381 = vpop.f32.mrf.mxu0
      %v2382 = vadd.f32 0.0, %v2381
      %v2383 = vpop.f32.mrf.mxu0
      %v2384 = vadd.f32 0.0, %v2383
      %2385 = vmatmul.bf16.gmra.mxu0 %v2335
      %v2386 = vpop.f32.mrf.mxu0
      %v2387 = vadd.f32 0.0, %v2386
      %v2388 = vpop.f32.mrf.mxu0
      %v2389 = vadd.f32 0.0, %v2388
      %2390 = vmatmul.bf16.gmra.mxu0 %v2338
      %v2391 = vpop.f32.mrf.mxu0
      %v2392 = vadd.f32 0.0, %v2391
      %v2393 = vpop.f32.mrf.mxu0
      %v2394 = vadd.f32 0.0, %v2393
      %2395 = vmatmul.bf16.gmra.mxu0 %v2341
      %v2396 = vpop.f32.mrf.mxu0
      %v2397 = vadd.f32 0.0, %v2396
      %v2398 = vpop.f32.mrf.mxu0
      %v2399 = vadd.f32 0.0, %v2398
      %2400 = vdwg.mxu0
      %2401 = vmatpush.bf16.msra.mxu0 0
      %2402 = vmatpush.bf16.msra.mxu0 0
      %2403 = vmatpush.bf16.msra.mxu0 0
      %2404 = vmatpush.bf16.msra.mxu0 0
      %2405 = vmatpush.bf16.msra.mxu0 0
      %2406 = vmatpush.bf16.msra.mxu0 0
      %2407 = vmatpush.bf16.msra.mxu0 0
      %2408 = vmatpush.bf16.msra.mxu0 %v2347
      %2409 = vmatmul.bf16.gmra.mxu0 %v2320
      %v2410 = vpop.f32.mrf.mxu0
      %v2411 = vadd.f32 0.0, %v2410
      %v2412 = vpop.f32.mrf.mxu0
      %v2413 = vadd.f32 0.0, %v2412
      %2414 = vmatmul.bf16.gmra.mxu0 %v2323
      %v2415 = vpop.f32.mrf.mxu0
      %v2416 = vadd.f32 0.0, %v2415
      %v2417 = vpop.f32.mrf.mxu0
      %v2418 = vadd.f32 0.0, %v2417
      %2419 = vmatmul.bf16.gmra.mxu0 %v2326
      %v2420 = vpop.f32.mrf.mxu0
      %v2421 = vadd.f32 0.0, %v2420
      %v2422 = vpop.f32.mrf.mxu0
      %v2423 = vadd.f32 0.0, %v2422
      %2424 = vmatmul.bf16.gmra.mxu0 %v2329
      %v2425 = vpop.f32.mrf.mxu0
      %v2426 = vadd.f32 0.0, %v2425
      %v2427 = vpop.f32.mrf.mxu0
      %v2428 = vadd.f32 0.0, %v2427
      %2429 = vmatmul.bf16.gmra.mxu0 %v2332
      %v2430 = vpop.f32.mrf.mxu0
      %v2431 = vadd.f32 0.0, %v2430
      %v2432 = vpop.f32.mrf.mxu0
      %v2433 = vadd.f32 0.0, %v2432
      %2434 = vmatmul.bf16.gmra.mxu0 %v2335
      %v2435 = vpop.f32.mrf.mxu0
      %v2436 = vadd.f32 0.0, %v2435
      %v2437 = vpop.f32.mrf.mxu0
      %v2438 = vadd.f32 0.0, %v2437
      %2439 = vmatmul.bf16.gmra.mxu0 %v2338
      %v2440 = vpop.f32.mrf.mxu0
      %v2441 = vadd.f32 0.0, %v2440
      %v2442 = vpop.f32.mrf.mxu0
      %v2443 = vadd.f32 0.0, %v2442
      %2444 = vmatmul.bf16.gmra.mxu0 %v2341
      %v2445 = vpop.f32.mrf.mxu0
      %v2446 = vadd.f32 0.0, %v2445
      %v2447 = vpop.f32.mrf.mxu0
      %v2448 = vadd.f32 0.0, %v2447
      %2449 = vdwg.mxu0
      %2450 = vmatpush.bf16.msra.mxu0 0
      %2451 = vmatpush.bf16.msra.mxu0 0
      %2452 = vmatpush.bf16.msra.mxu0 0
      %2453 = vmatpush.bf16.msra.mxu0 0
      %2454 = vmatpush.bf16.msra.mxu0 0
      %2455 = vmatpush.bf16.msra.mxu0 0
      %2456 = vmatpush.bf16.msra.mxu0 0
      %2457 = vmatpush.bf16.msra.mxu0 %v2350
      %2458 = vmatmul.bf16.gmra.mxu0 %v2320
      %v2459 = vpop.f32.mrf.mxu0
      %v2460 = vadd.f32 0.0, %v2459
      %v2461 = vpop.f32.mrf.mxu0
      %v2462 = vadd.f32 0.0, %v2461
      %2463 = vmatmul.bf16.gmra.mxu0 %v2323
      %v2464 = vpop.f32.mrf.mxu0
      %v2465 = vadd.f32 0.0, %v2464
      %v2466 = vpop.f32.mrf.mxu0
      %v2467 = vadd.f32 0.0, %v2466
      %2468 = vmatmul.bf16.gmra.mxu0 %v2326
      %v2469 = vpop.f32.mrf.mxu0
      %v2470 = vadd.f32 0.0, %v2469
      %v2471 = vpop.f32.mrf.mxu0
      %v2472 = vadd.f32 0.0, %v2471
      %2473 = vmatmul.bf16.gmra.mxu0 %v2329
      %v2474 = vpop.f32.mrf.mxu0
      %v2475 = vadd.f32 0.0, %v2474
      %v2476 = vpop.f32.mrf.mxu0
      %v2477 = vadd.f32 0.0, %v2476
      %2478 = vmatmul.bf16.gmra.mxu0 %v2332
      %v2479 = vpop.f32.mrf.mxu0
      %v2480 = vadd.f32 0.0, %v2479
      %v2481 = vpop.f32.mrf.mxu0
      %v2482 = vadd.f32 0.0, %v2481
      %2483 = vmatmul.bf16.gmra.mxu0 %v2335
      %v2484 = vpop.f32.mrf.mxu0
      %v2485 = vadd.f32 0.0, %v2484
      %v2486 = vpop.f32.mrf.mxu0
      %v2487 = vadd.f32 0.0, %v2486
      %2488 = vmatmul.bf16.gmra.mxu0 %v2338
      %v2489 = vpop.f32.mrf.mxu0
      %v2490 = vadd.f32 0.0, %v2489
      %v2491 = vpop.f32.mrf.mxu0
      %v2492 = vadd.f32 0.0, %v2491
      %2493 = vmatmul.bf16.gmra.mxu0 %v2341
      %v2494 = vpop.f32.mrf.mxu0
      %v2495 = vadd.f32 0.0, %v2494
      %v2496 = vpop.f32.mrf.mxu0
      %v2497 = vadd.f32 0.0, %v2496
      %2498 = vdwg.mxu0
      %v2499 = vadd.f32 %v2202, %v2362
      %v2500 = vadd.f32 %v2203, %v2411
      %v2501 = vadd.f32 %v2204, %v2460
      %v2502 = vadd.f32 %v2205, %v2364
      %v2503 = vadd.f32 %v2206, %v2413
      %v2504 = vadd.f32 %v2207, %v2462
      %v2505 = vadd.f32 %v2208, %v2367
      %v2506 = vadd.f32 %v2209, %v2416
      %v2507 = vadd.f32 %v2210, %v2465
      %v2508 = vadd.f32 %v2211, %v2369
      %v2509 = vadd.f32 %v2212, %v2418
      %v2510 = vadd.f32 %v2213, %v2467
      %v2511 = vadd.f32 %v2214, %v2372
      %v2512 = vadd.f32 %v2215, %v2421
      %v2513 = vadd.f32 %v2216, %v2470
      %v2514 = vadd.f32 %v2217, %v2374
      %v2515 = vadd.f32 %v2218, %v2423
      %v2516 = vadd.f32 %v2219, %v2472
      %v2517 = vadd.f32 %v2220, %v2377
      %v2518 = vadd.f32 %v2221, %v2426
      %v2519 = vadd.f32 %v2222, %v2475
      %v2520 = vadd.f32 %v2223, %v2379
      %v2521 = vadd.f32 %v2224, %v2428
      %v2522 = vadd.f32 %v2225, %v2477
      %v2523 = vadd.f32 %v2226, %v2382
      %v2524 = vadd.f32 %v2227, %v2431
      %v2525 = vadd.f32 %v2228, %v2480
      %v2526 = vadd.f32 %v2229, %v2384
      %v2527 = vadd.f32 %v2230, %v2433
      %v2528 = vadd.f32 %v2231, %v2482
      %v2529 = vadd.f32 %v2232, %v2387
      %v2530 = vadd.f32 %v2233, %v2436
      %v2531 = vadd.f32 %v2234, %v2485
      %v2532 = vadd.f32 %v2235, %v2389
      %v2533 = vadd.f32 %v2236, %v2438
      %v2534 = vadd.f32 %v2237, %v2487
      %v2535 = vadd.f32 %v2238, %v2392
      %v2536 = vadd.f32 %v2239, %v2441
      %v2537 = vadd.f32 %v2240, %v2490
      %v2538 = vadd.f32 %v2241, %v2394
      %v2539 = vadd.f32 %v2242, %v2443
      %v2540 = vadd.f32 %v2243, %v2492
      %v2541 = vadd.f32 %v2244, %v2397
      %v2542 = vadd.f32 %v2245, %v2446
      %v2543 = vadd.f32 %v2246, %v2495
      %v2544 = vadd.f32 %v2247, %v2399
      %v2545 = vadd.f32 %v2248, %v2448
      %v2546 = vadd.f32 %v2249, %v2497
      %s2547 = scalar_lea.vmem %s245, 512
      %v2548 = vld [vmem:[%s2547] sm:$0xf]
      %v2549 = vld [vmem:[%s2547 + $0x4] sm:$0xf]
      %v2550 = vld [vmem:[%s2547 + $0x8] sm:$0xf]
      %v2551 = vld [vmem:[%s2547 + $0xc] sm:$0xf]
      %v2552 = vld [vmem:[%s2547 + $0x10] sm:$0xf]
      %v2553 = vld [vmem:[%s2547 + $0x14] sm:$0xf]
      %v2554 = vld [vmem:[%s2547 + $0x18] sm:$0xf]
      %v2555 = vld [vmem:[%s2547 + $0x1c] sm:$0xf]
      %v2556 = vld [vmem:[%s2547 + $0x20] sm:$0xf]
      %v2557 = vld [vmem:[%s2547 + $0x24] sm:$0xf]
      %v2558 = vld [vmem:[%s2547 + $0x28] sm:$0xf]
      %v2559 = vld [vmem:[%s2547 + $0x2c] sm:$0xf]
      %v2560 = vld [vmem:[%s2547 + $0x30] sm:$0xf]
      %v2561 = vld [vmem:[%s2547 + $0x34] sm:$0xf]
      %v2562 = vld [vmem:[%s2547 + $0x38] sm:$0xf]
      %v2563 = vld [vmem:[%s2547 + $0x3c] sm:$0xf]
      %v2580 = vunpack.c.l.b16 %v2548
      %v2581 = vunpack.c.l.b16 %v2549
      %v2582 = vunpack.c.l.b16 %v2550
      %v2583 = vunpack.c.l.b16 %v2551
      %v2584 = vunpack.c.l.b16 %v2552
      %v2585 = vunpack.c.l.b16 %v2553
      %v2586 = vunpack.c.l.b16 %v2554
      %v2587 = vunpack.c.l.b16 %v2555
      %v2588 = vunpack.c.l.b16 %v2556
      %v2589 = vunpack.c.l.b16 %v2557
      %v2590 = vunpack.c.l.b16 %v2558
      %v2591 = vunpack.c.l.b16 %v2559
      %v2592 = vunpack.c.l.b16 %v2560
      %v2593 = vunpack.c.l.b16 %v2561
      %v2594 = vunpack.c.l.b16 %v2562
      %v2595 = vunpack.c.l.b16 %v2563
      %v2596 = vpack.c.b16 %v2581, %v2580
      %v2597 = vpack.c.b16 %v2583, %v2582
      %v2598 = vpack.c.b16 %v2585, %v2584
      %v2599 = vpack.c.b16 %v2587, %v2586
      %v2600 = vpack.c.b16 %v2589, %v2588
      %v2601 = vpack.c.b16 %v2591, %v2590
      %v2602 = vpack.c.b16 %v2593, %v2592
      %v2603 = vpack.c.b16 %v2595, %v2594
      %2604 = vrot.lane.b32.xlu0 %v347, 90
      %v2605 = vpop.permute.xlu0 %2604
      %2606 = vrot.lane.b32.xlu0 %v348, 90
      %v2607 = vpop.permute.xlu0 %2606
      %2608 = vrot.lane.b32.xlu0 %v349, 90
      %v2609 = vpop.permute.xlu0 %2608
      %2610 = vrot.lane.b32.xlu0 %v350, 90
      %v2611 = vpop.permute.xlu0 %2610
      %vm2612 = vcmask 736256
      %v2613 = vsel %vm2612, %v2605, %v2607
      %v2614 = vsel %vm2612, %v2607, %v2609
      %v2615 = vsel %vm2612, %v2609, %v2611
      %v2617 = vsel %vm363, %v2596, 0
      %v2620 = vsel %vm363, %v2597, 0
      %v2623 = vsel %vm363, %v2598, 0
      %v2626 = vsel %vm363, %v2599, 0
      %v2629 = vsel %vm363, %v2600, 0
      %v2632 = vsel %vm363, %v2601, 0
      %v2635 = vsel %vm363, %v2602, 0
      %v2638 = vsel %vm363, %v2603, 0
      %v2641 = vsel %vm388, %v2613, 0
      %v2644 = vsel %vm388, %v2614, 0
      %v2647 = vsel %vm388, %v2615, 0
      %2649 = vmatpush.bf16.msra.mxu0 0
      %2650 = vmatpush.bf16.msra.mxu0 0
      %2651 = vmatpush.bf16.msra.mxu0 0
      %2652 = vmatpush.bf16.msra.mxu0 0
      %2653 = vmatpush.bf16.msra.mxu0 0
      %2654 = vmatpush.bf16.msra.mxu0 0
      %2655 = vmatpush.bf16.msra.mxu0 0
      %2656 = vmatpush.bf16.msra.mxu0 %v2641
      %2657 = vmatmul.bf16.gmra.mxu0 %v2617
      %v2658 = vpop.f32.mrf.mxu0
      %v2659 = vadd.f32 0.0, %v2658
      %v2660 = vpop.f32.mrf.mxu0
      %v2661 = vadd.f32 0.0, %v2660
      %2662 = vmatmul.bf16.gmra.mxu0 %v2620
      %v2663 = vpop.f32.mrf.mxu0
      %v2664 = vadd.f32 0.0, %v2663
      %v2665 = vpop.f32.mrf.mxu0
      %v2666 = vadd.f32 0.0, %v2665
      %2667 = vmatmul.bf16.gmra.mxu0 %v2623
      %v2668 = vpop.f32.mrf.mxu0
      %v2669 = vadd.f32 0.0, %v2668
      %v2670 = vpop.f32.mrf.mxu0
      %v2671 = vadd.f32 0.0, %v2670
      %2672 = vmatmul.bf16.gmra.mxu0 %v2626
      %v2673 = vpop.f32.mrf.mxu0
      %v2674 = vadd.f32 0.0, %v2673
      %v2675 = vpop.f32.mrf.mxu0
      %v2676 = vadd.f32 0.0, %v2675
      %2677 = vmatmul.bf16.gmra.mxu0 %v2629
      %v2678 = vpop.f32.mrf.mxu0
      %v2679 = vadd.f32 0.0, %v2678
      %v2680 = vpop.f32.mrf.mxu0
      %v2681 = vadd.f32 0.0, %v2680
      %2682 = vmatmul.bf16.gmra.mxu0 %v2632
      %v2683 = vpop.f32.mrf.mxu0
      %v2684 = vadd.f32 0.0, %v2683
      %v2685 = vpop.f32.mrf.mxu0
      %v2686 = vadd.f32 0.0, %v2685
      %2687 = vmatmul.bf16.gmra.mxu0 %v2635
      %v2688 = vpop.f32.mrf.mxu0
      %v2689 = vadd.f32 0.0, %v2688
      %v2690 = vpop.f32.mrf.mxu0
      %v2691 = vadd.f32 0.0, %v2690
      %2692 = vmatmul.bf16.gmra.mxu0 %v2638
      %v2693 = vpop.f32.mrf.mxu0
      %v2694 = vadd.f32 0.0, %v2693
      %v2695 = vpop.f32.mrf.mxu0
      %v2696 = vadd.f32 0.0, %v2695
      %2697 = vdwg.mxu0
      %2698 = vmatpush.bf16.msra.mxu0 0
      %2699 = vmatpush.bf16.msra.mxu0 0
      %2700 = vmatpush.bf16.msra.mxu0 0
      %2701 = vmatpush.bf16.msra.mxu0 0
      %2702 = vmatpush.bf16.msra.mxu0 0
      %2703 = vmatpush.bf16.msra.mxu0 0
      %2704 = vmatpush.bf16.msra.mxu0 0
      %2705 = vmatpush.bf16.msra.mxu0 %v2644
      %2706 = vmatmul.bf16.gmra.mxu0 %v2617
      %v2707 = vpop.f32.mrf.mxu0
      %v2708 = vadd.f32 0.0, %v2707
      %v2709 = vpop.f32.mrf.mxu0
      %v2710 = vadd.f32 0.0, %v2709
      %2711 = vmatmul.bf16.gmra.mxu0 %v2620
      %v2712 = vpop.f32.mrf.mxu0
      %v2713 = vadd.f32 0.0, %v2712
      %v2714 = vpop.f32.mrf.mxu0
      %v2715 = vadd.f32 0.0, %v2714
      %2716 = vmatmul.bf16.gmra.mxu0 %v2623
      %v2717 = vpop.f32.mrf.mxu0
      %v2718 = vadd.f32 0.0, %v2717
      %v2719 = vpop.f32.mrf.mxu0
      %v2720 = vadd.f32 0.0, %v2719
      %2721 = vmatmul.bf16.gmra.mxu0 %v2626
      %v2722 = vpop.f32.mrf.mxu0
      %v2723 = vadd.f32 0.0, %v2722
      %v2724 = vpop.f32.mrf.mxu0
      %v2725 = vadd.f32 0.0, %v2724
      %2726 = vmatmul.bf16.gmra.mxu0 %v2629
      %v2727 = vpop.f32.mrf.mxu0
      %v2728 = vadd.f32 0.0, %v2727
      %v2729 = vpop.f32.mrf.mxu0
      %v2730 = vadd.f32 0.0, %v2729
      %2731 = vmatmul.bf16.gmra.mxu0 %v2632
      %v2732 = vpop.f32.mrf.mxu0
      %v2733 = vadd.f32 0.0, %v2732
      %v2734 = vpop.f32.mrf.mxu0
      %v2735 = vadd.f32 0.0, %v2734
      %2736 = vmatmul.bf16.gmra.mxu0 %v2635
      %v2737 = vpop.f32.mrf.mxu0
      %v2738 = vadd.f32 0.0, %v2737
      %v2739 = vpop.f32.mrf.mxu0
      %v2740 = vadd.f32 0.0, %v2739
      %2741 = vmatmul.bf16.gmra.mxu0 %v2638
      %v2742 = vpop.f32.mrf.mxu0
      %v2743 = vadd.f32 0.0, %v2742
      %v2744 = vpop.f32.mrf.mxu0
      %v2745 = vadd.f32 0.0, %v2744
      %2746 = vdwg.mxu0
      %2747 = vmatpush.bf16.msra.mxu0 0
      %2748 = vmatpush.bf16.msra.mxu0 0
      %2749 = vmatpush.bf16.msra.mxu0 0
      %2750 = vmatpush.bf16.msra.mxu0 0
      %2751 = vmatpush.bf16.msra.mxu0 0
      %2752 = vmatpush.bf16.msra.mxu0 0
      %2753 = vmatpush.bf16.msra.mxu0 0
      %2754 = vmatpush.bf16.msra.mxu0 %v2647
      %2755 = vmatmul.bf16.gmra.mxu0 %v2617
      %v2756 = vpop.f32.mrf.mxu0
      %v2757 = vadd.f32 0.0, %v2756
      %v2758 = vpop.f32.mrf.mxu0
      %v2759 = vadd.f32 0.0, %v2758
      %2760 = vmatmul.bf16.gmra.mxu0 %v2620
      %v2761 = vpop.f32.mrf.mxu0
      %v2762 = vadd.f32 0.0, %v2761
      %v2763 = vpop.f32.mrf.mxu0
      %v2764 = vadd.f32 0.0, %v2763
      %2765 = vmatmul.bf16.gmra.mxu0 %v2623
      %v2766 = vpop.f32.mrf.mxu0
      %v2767 = vadd.f32 0.0, %v2766
      %v2768 = vpop.f32.mrf.mxu0
      %v2769 = vadd.f32 0.0, %v2768
      %2770 = vmatmul.bf16.gmra.mxu0 %v2626
      %v2771 = vpop.f32.mrf.mxu0
      %v2772 = vadd.f32 0.0, %v2771
      %v2773 = vpop.f32.mrf.mxu0
      %v2774 = vadd.f32 0.0, %v2773
      %2775 = vmatmul.bf16.gmra.mxu0 %v2629
      %v2776 = vpop.f32.mrf.mxu0
      %v2777 = vadd.f32 0.0, %v2776
      %v2778 = vpop.f32.mrf.mxu0
      %v2779 = vadd.f32 0.0, %v2778
      %2780 = vmatmul.bf16.gmra.mxu0 %v2632
      %v2781 = vpop.f32.mrf.mxu0
      %v2782 = vadd.f32 0.0, %v2781
      %v2783 = vpop.f32.mrf.mxu0
      %v2784 = vadd.f32 0.0, %v2783
      %2785 = vmatmul.bf16.gmra.mxu0 %v2635
      %v2786 = vpop.f32.mrf.mxu0
      %v2787 = vadd.f32 0.0, %v2786
      %v2788 = vpop.f32.mrf.mxu0
      %v2789 = vadd.f32 0.0, %v2788
      %2790 = vmatmul.bf16.gmra.mxu0 %v2638
      %v2791 = vpop.f32.mrf.mxu0
      %v2792 = vadd.f32 0.0, %v2791
      %v2793 = vpop.f32.mrf.mxu0
      %v2794 = vadd.f32 0.0, %v2793
      %2795 = vdwg.mxu0
      %v2796 = vadd.f32 %v2499, %v2659
      %v2797 = vadd.f32 %v2500, %v2708
      %v2798 = vadd.f32 %v2501, %v2757
      %v2799 = vadd.f32 %v2502, %v2661
      %v2800 = vadd.f32 %v2503, %v2710
      %v2801 = vadd.f32 %v2504, %v2759
      %v2802 = vadd.f32 %v2505, %v2664
      %v2803 = vadd.f32 %v2506, %v2713
      %v2804 = vadd.f32 %v2507, %v2762
      %v2805 = vadd.f32 %v2508, %v2666
      %v2806 = vadd.f32 %v2509, %v2715
      %v2807 = vadd.f32 %v2510, %v2764
      %v2808 = vadd.f32 %v2511, %v2669
      %v2809 = vadd.f32 %v2512, %v2718
      %v2810 = vadd.f32 %v2513, %v2767
      %v2811 = vadd.f32 %v2514, %v2671
      %v2812 = vadd.f32 %v2515, %v2720
      %v2813 = vadd.f32 %v2516, %v2769
      %v2814 = vadd.f32 %v2517, %v2674
      %v2815 = vadd.f32 %v2518, %v2723
      %v2816 = vadd.f32 %v2519, %v2772
      %v2817 = vadd.f32 %v2520, %v2676
      %v2818 = vadd.f32 %v2521, %v2725
      %v2819 = vadd.f32 %v2522, %v2774
      %v2820 = vadd.f32 %v2523, %v2679
      %v2821 = vadd.f32 %v2524, %v2728
      %v2822 = vadd.f32 %v2525, %v2777
      %v2823 = vadd.f32 %v2526, %v2681
      %v2824 = vadd.f32 %v2527, %v2730
      %v2825 = vadd.f32 %v2528, %v2779
      %v2826 = vadd.f32 %v2529, %v2684
      %v2827 = vadd.f32 %v2530, %v2733
      %v2828 = vadd.f32 %v2531, %v2782
      %v2829 = vadd.f32 %v2532, %v2686
      %v2830 = vadd.f32 %v2533, %v2735
      %v2831 = vadd.f32 %v2534, %v2784
      %v2832 = vadd.f32 %v2535, %v2689
      %v2833 = vadd.f32 %v2536, %v2738
      %v2834 = vadd.f32 %v2537, %v2787
      %v2835 = vadd.f32 %v2538, %v2691
      %v2836 = vadd.f32 %v2539, %v2740
      %v2837 = vadd.f32 %v2540, %v2789
      %v2838 = vadd.f32 %v2541, %v2694
      %v2839 = vadd.f32 %v2542, %v2743
      %v2840 = vadd.f32 %v2543, %v2792
      %v2841 = vadd.f32 %v2544, %v2696
      %v2842 = vadd.f32 %v2545, %v2745
      %v2843 = vadd.f32 %v2546, %v2794
      %v2844 = vld [vmem:[%s250] sm:$0xff]
      %v2845 = vld [vmem:[%s250 + $0x8] sm:$0xff]
      %v2846 = vld [vmem:[%s250 + $0x10] sm:$0xff]
      %v2847 = vld [vmem:[%s250 + $0x18] sm:$0xff]
      %v2848 = vld [vmem:[%s250 + $0x20] sm:$0xff]
      %v2849 = vld [vmem:[%s250 + $0x28] sm:$0xff]
      %v2850 = vld [vmem:[%s250 + $0x30] sm:$0xff]
      %v2851 = vld [vmem:[%s250 + $0x38] sm:$0xff]
      %v2852 = vld [vmem:[%s250 + $0x40] sm:$0xff]
      %v2853 = vld [vmem:[%s250 + $0x48] sm:$0xff]
      %v2854 = vld [vmem:[%s250 + $0x50] sm:$0xff]
      %v2855 = vld [vmem:[%s250 + $0x58] sm:$0xff]
      %v2856 = vld [vmem:[%s250 + $0x60] sm:$0xff]
      %v2857 = vld [vmem:[%s250 + $0x68] sm:$0xff]
      %v2858 = vld [vmem:[%s250 + $0x70] sm:$0xff]
      %v2859 = vld [vmem:[%s250 + $0x78] sm:$0xff]
      %2861 = vset.pattern.permute.xlu0 0
      %2862 = vperm.xlu0 %2861, %v2844
      %v2863 = vpop.permute.xlu0 %2862
      %2866 = vset.pattern.permute.xlu0 0
      %2867 = vperm.xlu0 %2866, %v2845
      %v2868 = vpop.permute.xlu0 %2867
      %2871 = vset.pattern.permute.xlu0 0
      %2872 = vperm.xlu0 %2871, %v2846
      %v2873 = vpop.permute.xlu0 %2872
      %2876 = vset.pattern.permute.xlu0 0
      %2877 = vperm.xlu0 %2876, %v2847
      %v2878 = vpop.permute.xlu0 %2877
      %2881 = vset.pattern.permute.xlu0 0
      %2882 = vperm.xlu0 %2881, %v2848
      %v2883 = vpop.permute.xlu0 %2882
      %2886 = vset.pattern.permute.xlu0 0
      %2887 = vperm.xlu0 %2886, %v2849
      %v2888 = vpop.permute.xlu0 %2887
      %2891 = vset.pattern.permute.xlu0 0
      %2892 = vperm.xlu0 %2891, %v2850
      %v2893 = vpop.permute.xlu0 %2892
      %2896 = vset.pattern.permute.xlu0 0
      %2897 = vperm.xlu0 %2896, %v2851
      %v2898 = vpop.permute.xlu0 %2897
      %2901 = vset.pattern.permute.xlu0 0
      %2902 = vperm.xlu0 %2901, %v2852
      %v2903 = vpop.permute.xlu0 %2902
      %2906 = vset.pattern.permute.xlu0 0
      %2907 = vperm.xlu0 %2906, %v2853
      %v2908 = vpop.permute.xlu0 %2907
      %2911 = vset.pattern.permute.xlu0 0
      %2912 = vperm.xlu0 %2911, %v2854
      %v2913 = vpop.permute.xlu0 %2912
      %2916 = vset.pattern.permute.xlu0 0
      %2917 = vperm.xlu0 %2916, %v2855
      %v2918 = vpop.permute.xlu0 %2917
      %2921 = vset.pattern.permute.xlu0 0
      %2922 = vperm.xlu0 %2921, %v2856
      %v2923 = vpop.permute.xlu0 %2922
      %2926 = vset.pattern.permute.xlu0 0
      %2927 = vperm.xlu0 %2926, %v2857
      %v2928 = vpop.permute.xlu0 %2927
      %2931 = vset.pattern.permute.xlu0 0
      %2932 = vperm.xlu0 %2931, %v2858
      %v2933 = vpop.permute.xlu0 %2932
      %2936 = vset.pattern.permute.xlu0 0
      %2937 = vperm.xlu0 %2936, %v2859
      %v2938 = vpop.permute.xlu0 %2937
      %v2940 = vadd.f32 %v2796, %v2863
      %v2941 = vadd.f32 %v2797, %v2863
      %v2942 = vadd.f32 %v2798, %v2863
      %v2943 = vadd.f32 %v2799, %v2868
      %v2944 = vadd.f32 %v2800, %v2868
      %v2945 = vadd.f32 %v2801, %v2868
      %v2946 = vadd.f32 %v2802, %v2873
      %v2947 = vadd.f32 %v2803, %v2873
      %v2948 = vadd.f32 %v2804, %v2873
      %v2949 = vadd.f32 %v2805, %v2878
      %v2950 = vadd.f32 %v2806, %v2878
      %v2951 = vadd.f32 %v2807, %v2878
      %v2952 = vadd.f32 %v2808, %v2883
      %v2953 = vadd.f32 %v2809, %v2883
      %v2954 = vadd.f32 %v2810, %v2883
      %v2955 = vadd.f32 %v2811, %v2888
      %v2956 = vadd.f32 %v2812, %v2888
      %v2957 = vadd.f32 %v2813, %v2888
      %v2958 = vadd.f32 %v2814, %v2893
      %v2959 = vadd.f32 %v2815, %v2893
      %v2960 = vadd.f32 %v2816, %v2893
      %v2961 = vadd.f32 %v2817, %v2898
      %v2962 = vadd.f32 %v2818, %v2898
      %v2963 = vadd.f32 %v2819, %v2898
      %v2964 = vadd.f32 %v2820, %v2903
      %v2965 = vadd.f32 %v2821, %v2903
      %v2966 = vadd.f32 %v2822, %v2903
      %v2967 = vadd.f32 %v2823, %v2908
      %v2968 = vadd.f32 %v2824, %v2908
      %v2969 = vadd.f32 %v2825, %v2908
      %v2970 = vadd.f32 %v2826, %v2913
      %v2971 = vadd.f32 %v2827, %v2913
      %v2972 = vadd.f32 %v2828, %v2913
      %v2973 = vadd.f32 %v2829, %v2918
      %v2974 = vadd.f32 %v2830, %v2918
      %v2975 = vadd.f32 %v2831, %v2918
      %v2976 = vadd.f32 %v2832, %v2923
      %v2977 = vadd.f32 %v2833, %v2923
      %v2978 = vadd.f32 %v2834, %v2923
      %v2979 = vadd.f32 %v2835, %v2928
      %v2980 = vadd.f32 %v2836, %v2928
      %v2981 = vadd.f32 %v2837, %v2928
      %v2982 = vadd.f32 %v2838, %v2933
      %v2983 = vadd.f32 %v2839, %v2933
      %v2984 = vadd.f32 %v2840, %v2933
      %v2985 = vadd.f32 %v2841, %v2938
      %v2986 = vadd.f32 %v2842, %v2938
      %v2987 = vadd.f32 %v2843, %v2938
      %v2988 = vmax.f32 %v2940, 0.0
      %v2989 = vmax.f32 %v2941, 0.0
      %v2990 = vmax.f32 %v2942, 0.0
      %v2991 = vmax.f32 %v2943, 0.0
      %v2992 = vmax.f32 %v2944, 0.0
      %v2993 = vmax.f32 %v2945, 0.0
      %v2994 = vmax.f32 %v2946, 0.0
      %v2995 = vmax.f32 %v2947, 0.0
      %v2996 = vmax.f32 %v2948, 0.0
      %v2997 = vmax.f32 %v2949, 0.0
      %v2998 = vmax.f32 %v2950, 0.0
      %v2999 = vmax.f32 %v2951, 0.0
      %v3000 = vmax.f32 %v2952, 0.0
      %v3001 = vmax.f32 %v2953, 0.0
      %v3002 = vmax.f32 %v2954, 0.0
      %v3003 = vmax.f32 %v2955, 0.0
      %v3004 = vmax.f32 %v2956, 0.0
      %v3005 = vmax.f32 %v2957, 0.0
      %v3006 = vmax.f32 %v2958, 0.0
      %v3007 = vmax.f32 %v2959, 0.0
      %v3008 = vmax.f32 %v2960, 0.0
      %v3009 = vmax.f32 %v2961, 0.0
      %v3010 = vmax.f32 %v2962, 0.0
      %v3011 = vmax.f32 %v2963, 0.0
      %v3012 = vmax.f32 %v2964, 0.0
      %v3013 = vmax.f32 %v2965, 0.0
      %v3014 = vmax.f32 %v2966, 0.0
      %v3015 = vmax.f32 %v2967, 0.0
      %v3016 = vmax.f32 %v2968, 0.0
      %v3017 = vmax.f32 %v2969, 0.0
      %v3018 = vmax.f32 %v2970, 0.0
      %v3019 = vmax.f32 %v2971, 0.0
      %v3020 = vmax.f32 %v2972, 0.0
      %v3021 = vmax.f32 %v2973, 0.0
      %v3022 = vmax.f32 %v2974, 0.0
      %v3023 = vmax.f32 %v2975, 0.0
      %v3024 = vmax.f32 %v2976, 0.0
      %v3025 = vmax.f32 %v2977, 0.0
      %v3026 = vmax.f32 %v2978, 0.0
      %v3027 = vmax.f32 %v2979, 0.0
      %v3028 = vmax.f32 %v2980, 0.0
      %v3029 = vmax.f32 %v2981, 0.0
      %v3030 = vmax.f32 %v2982, 0.0
      %v3031 = vmax.f32 %v2983, 0.0
      %v3032 = vmax.f32 %v2984, 0.0
      %v3033 = vmax.f32 %v2985, 0.0
      %v3034 = vmax.f32 %v2986, 0.0
      %v3035 = vmax.f32 %v2987, 0.0
      %3036 = vst [vmem:[%s263] sm:$0xff] %v2988
      %3037 = vst [vmem:[%s263 + $0x8] sm:$0xff] %v2989
      %3038 = vst [vmem:[%s263 + $0x10] sm:$0xff] %v2990
      %3039 = vst [vmem:[%s263 + $0x18] sm:$0xff] %v2991
      %3040 = vst [vmem:[%s263 + $0x20] sm:$0xff] %v2992
      %3041 = vst [vmem:[%s263 + $0x28] sm:$0xff] %v2993
      %3042 = vst [vmem:[%s263 + $0x30] sm:$0xff] %v2994
      %3043 = vst [vmem:[%s263 + $0x38] sm:$0xff] %v2995
      %3044 = vst [vmem:[%s263 + $0x40] sm:$0xff] %v2996
      %3045 = vst [vmem:[%s263 + $0x48] sm:$0xff] %v2997
      %3046 = vst [vmem:[%s263 + $0x50] sm:$0xff] %v2998
      %3047 = vst [vmem:[%s263 + $0x58] sm:$0xff] %v2999
      %3048 = vst [vmem:[%s263 + $0x60] sm:$0xff] %v3000
      %3049 = vst [vmem:[%s263 + $0x68] sm:$0xff] %v3001
      %3050 = vst [vmem:[%s263 + $0x70] sm:$0xff] %v3002
      %3051 = vst [vmem:[%s263 + $0x78] sm:$0xff] %v3003
      %3052 = vst [vmem:[%s263 + $0x80] sm:$0xff] %v3004
      %3053 = vst [vmem:[%s263 + $0x88] sm:$0xff] %v3005
      %3054 = vst [vmem:[%s263 + $0x90] sm:$0xff] %v3006
      %3055 = vst [vmem:[%s263 + $0x98] sm:$0xff] %v3007
      %3056 = vst [vmem:[%s263 + $0xa0] sm:$0xff] %v3008
      %3057 = vst [vmem:[%s263 + $0xa8] sm:$0xff] %v3009
      %3058 = vst [vmem:[%s263 + $0xb0] sm:$0xff] %v3010
      %3059 = vst [vmem:[%s263 + $0xb8] sm:$0xff] %v3011
      %3060 = vst [vmem:[%s263 + $0xc0] sm:$0xff] %v3012
      %3061 = vst [vmem:[%s263 + $0xc8] sm:$0xff] %v3013
      %3062 = vst [vmem:[%s263 + $0xd0] sm:$0xff] %v3014
      %3063 = vst [vmem:[%s263 + $0xd8] sm:$0xff] %v3015
      %3064 = vst [vmem:[%s263 + $0xe0] sm:$0xff] %v3016
      %3065 = vst [vmem:[%s263 + $0xe8] sm:$0xff] %v3017
      %3066 = vst [vmem:[%s263 + $0xf0] sm:$0xff] %v3018
      %3067 = vst [vmem:[%s263 + $0xf8] sm:$0xff] %v3019
      %3068 = vst [vmem:[%s263 + $0x100] sm:$0xff] %v3020
      %3069 = vst [vmem:[%s263 + $0x108] sm:$0xff] %v3021
      %3070 = vst [vmem:[%s263 + $0x110] sm:$0xff] %v3022
      %3071 = vst [vmem:[%s263 + $0x118] sm:$0xff] %v3023
      %3072 = vst [vmem:[%s263 + $0x120] sm:$0xff] %v3024
      %3073 = vst [vmem:[%s263 + $0x128] sm:$0xff] %v3025
      %3074 = vst [vmem:[%s263 + $0x130] sm:$0xff] %v3026
      %3075 = vst [vmem:[%s263 + $0x138] sm:$0xff] %v3027
      %3076 = vst [vmem:[%s263 + $0x140] sm:$0xff] %v3028
      %3077 = vst [vmem:[%s263 + $0x148] sm:$0xff] %v3029
      %3078 = vst [vmem:[%s263 + $0x150] sm:$0xff] %v3030
      %3079 = vst [vmem:[%s263 + $0x158] sm:$0xff] %v3031
      %3080 = vst [vmem:[%s263 + $0x160] sm:$0xff] %v3032
      %3081 = vst [vmem:[%s263 + $0x168] sm:$0xff] %v3033
      %3082 = vst [vmem:[%s263 + $0x170] sm:$0xff] %v3034
      %3083 = vst [vmem:[%s263 + $0x178] sm:$0xff] %v3035
      %s3084 = smul.u32 3, %s21
      %p3085 = scmp.lt.s32.totalorder %s19, 1
      %s3086 = scalar_select %p3085, %s19, 1
      %p3087 = scmp.lt.s32.totalorder %s20, 0
      %s3088 = scalar_select %p3087, %s20, 0
      %p3089 = scmp.lt.s32.totalorder %s3084, 2
      %s3090 = scalar_select %p3089, %s3084, 2
      %s3091 = smul.addr %s3088, 48
      %s3092 = sadd.s32 %s3090, %s3091
      %s3093 = smul.addr %s3086, 48
      %s3094 = sadd.s32 %s3092, %s3093
      %s3095 = smul.addr %s3094, 8
      %s3096 = scalar_lea.vmem %s3, %s3095
      // Predicated region
      $region33: #{conv_bn_act.1} parent=31 // pred_check
        %p3097 = pneg %p135
      $region34: #{conv_bn_act.1} parent=31 // pred_check_branch
        %3099 = sbr.rel (%p3097) target = $region36
      $region35: #{conv_bn_act.1} parent=31 // pred_region
        %s3100 = smul.u32 3, %s21
      $region36: #{conv_bn_act.1} parent=31 // pred_fallthru
        _
    $region32: #{conv_bn_act.1} parent=5 // pred_fallthru
      _
    %p3101 = scmp.le.s32.totalorder 2, %s9
    // Predicated region
    $region37: #{conv_bn_act.1} parent=5 // pred_check
      %p3102 = pneg %p3101
    $region38: #{conv_bn_act.1} parent=5 // pred_check_branch
      %3104 = sbr.rel (%p3102) target = $region40
    $region39: #{conv_bn_act.1} parent=5 // pred_region
      %s3105 = ssub.s32 %s9, 2
      // Predicated region
      $region41: #{conv_bn_act.1} parent=39 // pred_check
        %p3106 = pneg %p141
      $region42: #{conv_bn_act.1} parent=39 // pred_check_branch
        %3108 = sbr.rel (%p3106) target = $region44
      $region43: #{conv_bn_act.1} parent=39 // pred_region
        %s3109 = smul.u32 3, %s24
        %p3110 = scmp.lt.s32.totalorder %s22, 1
        %s3111 = scalar_select %p3110, %s22, 1
        %p3112 = scmp.lt.s32.totalorder %s23, 0
        %s3113 = scalar_select %p3112, %s23, 0
        %p3114 = scmp.lt.s32.totalorder %s3109, 2
        %s3115 = scalar_select %p3114, %s3109, 2
        %s3116 = smul.addr %s3113, 48
        %s3117 = sadd.s32 %s3115, %s3116
        %s3118 = smul.addr %s3111, 48
        %s3119 = sadd.s32 %s3117, %s3118
        %s3120 = smul.addr %s3119, 8
        %s3121 = scalar_lea.vmem %s3, %s3120
      $region44: #{conv_bn_act.1} parent=39 // pred_fallthru
        _
    $region40: #{conv_bn_act.1} parent=5 // pred_fallthru
      _
  $region6: #{conv_bn_act.1} parent=0 // loop_footer
    %s13 = sadd.s32 1, %s9
  $region7: #{conv_bn_act.1} parent=0 // loop_footer_branch
    %8 = sbr.rel target = $region3
  $region8: #{conv_bn_act.1} parent=0 // loop_exit
    _

</llo_original>
